<compile_context>
chip_gen: v7x
topology: tpu7x:2x2x1
jax: 0.10.0
libtpu: 0.0.40
codegen_flags: <defaults>
</compile_context>

<pallas_src>
import math

import jax
import jax.numpy as jnp
from jax.experimental import pallas as pl
from jax.experimental.pallas import tpu as pltpu

LANE = 128


def _round_up(x, m):
    return ((x + m - 1) // m) * m


# ----------------------------------------------------------------------------
# Pallas kernel: fused 3-branch 1-D convolution as one im2col + MXU matmul
# ----------------------------------------------------------------------------
def _hs_conv_kernel(x_ref, w_ref, b_ref, o_ref):
    # x_ref : (1, 1, L)       f32  one batch item, rows flattened at pitch R (padded)
    # w_ref : (Ctot, Kmax)    f32  fused, offset-aligned weights of the 3 branches
    # b_ref : (Ctot, 1)       f32  fused bias
    # o_ref : (1, Ctot, H*R)  f32  final lane-dense output block
    Kmax = w_ref.shape[1]
    HR = o_ref.shape[2]

    xrow = x_ref[0]                                   # (1, L) flattened padded input
    # im2col slab: slab[j, i] = xflat[i + j]  -- one static lane-shifted slice per tap.
    slab = jnp.concatenate(
        [xrow[:, j:j + HR] for j in range(Kmax)], axis=0)          # (Kmax, HR)

    # One MXU matmul performs the whole K-tap contraction for every fused channel,
    # electrode row and time step of this batch item (f32 accumulation).
    out = jnp.dot(w_ref[...], slab, preferred_element_type=jnp.float32)  # (Ctot, HR)
    o_ref[0] = out + b_ref[...]                        # single full-block store


# ----------------------------------------------------------------------------
# Module glue (max-norm weight renorm + branch fusion + wrapper)
# ----------------------------------------------------------------------------
def renorm_l2_dim0(w, max_norm):
    """torch.renorm(w, p=2, dim=0, maxnorm=max_norm)."""
    flat = w.reshape(w.shape[0], -1)
    norms = jnp.sqrt(jnp.sum(flat * flat, axis=1, keepdims=True))
    factor = jnp.where(norms > max_norm, max_norm / (norms + 1e-7), 1.0)
    return (flat * factor).reshape(w.shape)


def init_conv_params(key, out_channels, k):
    # Deterministic Conv2d-style init (uniform in +/- 1/sqrt(fan_in)).
    kw, kb = jax.random.split(key)
    fan_in = 1 * 1 * k
    bound = 1.0 / math.sqrt(fan_in)
    w = jax.random.uniform(kw, (out_channels, 1, 1, k), jnp.float32, -bound, bound)
    b = jax.random.uniform(kb, (out_channels,), jnp.float32, -bound, bound)
    return w, b


def hs_conv_init(key, channels=20, timekernel=25):
    k1, k2, k3 = jax.random.split(key, 3)
    return [
        init_conv_params(k1, channels, timekernel),
        init_conv_params(k2, channels, timekernel * 2),
        init_conv_params(k3, channels, timekernel * 3),
    ]


def hs_conv_forward(x, params, max_norm=2.0):
    """Forward pass of HS_Conv: cat of three 'same'-padded (1, K) convs along dim=1."""
    N, Cin, H, W = x.shape
    assert Cin == 1
    x = x.astype(jnp.float32)

    Ks = [int(w.shape[-1]) for w, _ in params]
    Kmax = max(Ks)
    pad_l_max = (Kmax - 1) // 2

    # --- Fuse the 3 branches into one offset-aligned weight block -------------
    # A branch with kernel size K and PyTorch 'same' left pad pad_l=(K-1)//2 placed at
    # offset (pad_l_max - pad_l) inside a Kmax-wide row is reproduced exactly by a
    # single valid conv over the pad_l_max-padded input.
    w_rows, b_rows = [], []
    for (w, b), K in zip(params, Ks):
        w = renorm_l2_dim0(w.astype(jnp.float32), max_norm)   # Conv2dWithConstraint
        C = w.shape[0]
        pad_l = (K - 1) // 2
        off = pad_l_max - pad_l
        w_big = jnp.zeros((C, Kmax), jnp.float32).at[:, off:off + K].set(w.reshape(C, K))
        w_rows.append(w_big)
        b_rows.append(b.astype(jnp.float32).reshape(C, 1))
    w_fused = jnp.concatenate(w_rows, axis=0)    # (Ctot, Kmax)  == torch.cat order
    b_fused = jnp.concatenate(b_rows, axis=0)    # (Ctot, 1)
    Ctot = w_fused.shape[0]

    # --- Flatten rows at a lane-aligned pitch R >= W + Kmax - 1 ----------------
    # Row h occupies xflat[h*R : (h+1)*R] = [0]*pad_l_max ++ x[h,:] ++ zeros, so the
    # valid conv over the flat vector yields every row's 'same' output at stride R
    # (positions t >= W per row are junk and get sliced off in the wrapper).
    R = _round_up(W + Kmax - 1, LANE)
    HR = H * R
    L = _round_up(HR + Kmax - 1, LANE)

    x3 = x.reshape(N, H, W)
    xrows = jnp.pad(x3, ((0, 0), (0, 0), (pad_l_max, R - W - pad_l_max)))  # (N, H, R)
    xflat = xrows.reshape(N, 1, HR)
    xflat = jnp.pad(xflat, ((0, 0), (0, 0), (0, L - HR)))                  # (N, 1, L)

    out = pl.pallas_call(
        _hs_conv_kernel,
        out_shape=jax.ShapeDtypeStruct((N, Ctot, HR), jnp.float32),
        grid=(N,),
        in_specs=[
            pl.BlockSpec((1, 1, L), lambda n: (n, 0, 0)),
            pl.BlockSpec((Ctot, Kmax), lambda n: (0, 0)),
            pl.BlockSpec((Ctot, 1), lambda n: (0, 0)),
        ],
        out_specs=pl.BlockSpec((1, Ctot, HR), lambda n: (n, 0, 0)),
        compiler_params=pltpu.CompilerParams(
            dimension_semantics=("parallel",)),
    )(xflat, w_fused, b_fused)

    out = out.reshape(N, Ctot, H, R)             # free metadata reshape
    return out[..., :W]                          # drop per-row pitch padding


# ----------------------------------------------------------------------------
# Pure-JAX reference (for correctness sanity check)
# ----------------------------------------------------------------------------
def hs_conv_reference(x, params, max_norm=2.0):
    outs = []
    for w, b in params:
        w = renorm_l2_dim0(w.astype(jnp.float32), max_norm)
        K = w.shape[-1]
        pad_l = (K - 1) // 2
        pad_r = (K - 1) - pad_l
        y = jax.lax.conv_general_dilated(
            x.astype(jnp.float32), w,
            window_strides=(1, 1),
            padding=[(0, 0), (pad_l, pad_r)],
            dimension_numbers=("NCHW", "OIHW", "NCHW"),
            precision=jax.lax.Precision.HIGHEST,
        )
        outs.append(y + b[None, :, None, None])
    return jnp.concatenate(outs, axis=1)


if __name__ == "__main__":
    key = jax.random.PRNGKey(0)
    kx, kp = jax.random.split(key)

    # Small, module-consistent shapes: N=2, C_in=1, H=4 (electrodes), W=128 (time).
    x = jax.random.normal(kx, (2, 1, 4, 128), dtype=jnp.float32)
    params = hs_conv_init(kp, channels=20, timekernel=25)

    # Quantize test data to the bf16 grid so the check is insensitive to the MXU's
    # internal bf16 splitting (products of bf16-representable values are exact in f32).
    x = x.astype(jnp.bfloat16).astype(jnp.float32)
    params = [(w.astype(jnp.bfloat16).astype(jnp.float32),
               b.astype(jnp.bfloat16).astype(jnp.float32)) for w, b in params]

    fwd = jax.jit(hs_conv_forward)
    out = jax.block_until_ready(fwd(x, params))
    assert out.shape == (2, 60, 4, 128), out.shape

    ref = jax.block_until_ready(hs_conv_reference(x, params))
    max_err = float(jnp.max(jnp.abs(out - ref)))
    assert max_err < 1e-3, f"max abs error {max_err}"

    print("KERNEL_OK")
</pallas_src>

<mosaic_0001>
module attributes {stable_mosaic.version = 11 : i64} {
  func.func @_hs_conv_kernel(%arg0: i32, %arg1: memref<1x1x1152xf32, #tpu.memory_space<vmem>>, %arg2: memref<60x75xf32, #tpu.memory_space<vmem>>, %arg3: memref<60x1xf32, #tpu.memory_space<vmem>>, %arg4: memref<1x60x1024xf32, #tpu.memory_space<vmem>>) attributes {dimension_semantics = [#tpu.dimension_semantics<parallel>], iteration_bounds = array<i64: 2>, scalar_prefetch = 0 : i64, scratch_operands = 0 : i64, tpu.core_type = #tpu.core_type<tc>, window_params = [{transform_indices = @transform_0, window_bounds = array<i64: 1, 1, 1152>}, {pipeline_mode = #tpu.pipeline_mode<synchronous>, transform_indices = @transform_1, window_bounds = array<i64: 60, 75>}, {pipeline_mode = #tpu.pipeline_mode<synchronous>, transform_indices = @transform_2, window_bounds = array<i64: 60, 1>}, {transform_indices = @transform_3, window_bounds = array<i64: 1, 60, 1024>}]} {
    %c0 = arith.constant 0 : index
    %c0_0 = arith.constant 0 : index
    %c0_1 = arith.constant 0 : index
    %0 = vector.load %arg1[%c0, %c0_0, %c0_1] : memref<1x1x1152xf32, #tpu.memory_space<vmem>>, vector<1x1x1152xf32>
    %1 = vector.shape_cast %0 : vector<1x1x1152xf32> to vector<1x1152xf32>
    %2 = vector.extract_strided_slice %1 {offsets = [0, 0], sizes = [1, 1024], strides = [1, 1]} : vector<1x1152xf32> to vector<1x1024xf32>
    %3 = vector.extract_strided_slice %1 {offsets = [0, 1], sizes = [1, 1024], strides = [1, 1]} : vector<1x1152xf32> to vector<1x1024xf32>
    %4 = vector.extract_strided_slice %1 {offsets = [0, 2], sizes = [1, 1024], strides = [1, 1]} : vector<1x1152xf32> to vector<1x1024xf32>
    %5 = vector.extract_strided_slice %1 {offsets = [0, 3], sizes = [1, 1024], strides = [1, 1]} : vector<1x1152xf32> to vector<1x1024xf32>
    %6 = vector.extract_strided_slice %1 {offsets = [0, 4], sizes = [1, 1024], strides = [1, 1]} : vector<1x1152xf32> to vector<1x1024xf32>
    %7 = vector.extract_strided_slice %1 {offsets = [0, 5], sizes = [1, 1024], strides = [1, 1]} : vector<1x1152xf32> to vector<1x1024xf32>
    %8 = vector.extract_strided_slice %1 {offsets = [0, 6], sizes = [1, 1024], strides = [1, 1]} : vector<1x1152xf32> to vector<1x1024xf32>
    %9 = vector.extract_strided_slice %1 {offsets = [0, 7], sizes = [1, 1024], strides = [1, 1]} : vector<1x1152xf32> to vector<1x1024xf32>
    %10 = vector.extract_strided_slice %1 {offsets = [0, 8], sizes = [1, 1024], strides = [1, 1]} : vector<1x1152xf32> to vector<1x1024xf32>
    %11 = vector.extract_strided_slice %1 {offsets = [0, 9], sizes = [1, 1024], strides = [1, 1]} : vector<1x1152xf32> to vector<1x1024xf32>
    %12 = vector.extract_strided_slice %1 {offsets = [0, 10], sizes = [1, 1024], strides = [1, 1]} : vector<1x1152xf32> to vector<1x1024xf32>
    %13 = vector.extract_strided_slice %1 {offsets = [0, 11], sizes = [1, 1024], strides = [1, 1]} : vector<1x1152xf32> to vector<1x1024xf32>
    %14 = vector.extract_strided_slice %1 {offsets = [0, 12], sizes = [1, 1024], strides = [1, 1]} : vector<1x1152xf32> to vector<1x1024xf32>
    %15 = vector.extract_strided_slice %1 {offsets = [0, 13], sizes = [1, 1024], strides = [1, 1]} : vector<1x1152xf32> to vector<1x1024xf32>
    %16 = vector.extract_strided_slice %1 {offsets = [0, 14], sizes = [1, 1024], strides = [1, 1]} : vector<1x1152xf32> to vector<1x1024xf32>
    %17 = vector.extract_strided_slice %1 {offsets = [0, 15], sizes = [1, 1024], strides = [1, 1]} : vector<1x1152xf32> to vector<1x1024xf32>
    %18 = vector.extract_strided_slice %1 {offsets = [0, 16], sizes = [1, 1024], strides = [1, 1]} : vector<1x1152xf32> to vector<1x1024xf32>
    %19 = vector.extract_strided_slice %1 {offsets = [0, 17], sizes = [1, 1024], strides = [1, 1]} : vector<1x1152xf32> to vector<1x1024xf32>
    %20 = vector.extract_strided_slice %1 {offsets = [0, 18], sizes = [1, 1024], strides = [1, 1]} : vector<1x1152xf32> to vector<1x1024xf32>
    %21 = vector.extract_strided_slice %1 {offsets = [0, 19], sizes = [1, 1024], strides = [1, 1]} : vector<1x1152xf32> to vector<1x1024xf32>
    %22 = vector.extract_strided_slice %1 {offsets = [0, 20], sizes = [1, 1024], strides = [1, 1]} : vector<1x1152xf32> to vector<1x1024xf32>
    %23 = vector.extract_strided_slice %1 {offsets = [0, 21], sizes = [1, 1024], strides = [1, 1]} : vector<1x1152xf32> to vector<1x1024xf32>
    %24 = vector.extract_strided_slice %1 {offsets = [0, 22], sizes = [1, 1024], strides = [1, 1]} : vector<1x1152xf32> to vector<1x1024xf32>
    %25 = vector.extract_strided_slice %1 {offsets = [0, 23], sizes = [1, 1024], strides = [1, 1]} : vector<1x1152xf32> to vector<1x1024xf32>
    %26 = vector.extract_strided_slice %1 {offsets = [0, 24], sizes = [1, 1024], strides = [1, 1]} : vector<1x1152xf32> to vector<1x1024xf32>
    %27 = vector.extract_strided_slice %1 {offsets = [0, 25], sizes = [1, 1024], strides = [1, 1]} : vector<1x1152xf32> to vector<1x1024xf32>
    %28 = vector.extract_strided_slice %1 {offsets = [0, 26], sizes = [1, 1024], strides = [1, 1]} : vector<1x1152xf32> to vector<1x1024xf32>
    %29 = vector.extract_strided_slice %1 {offsets = [0, 27], sizes = [1, 1024], strides = [1, 1]} : vector<1x1152xf32> to vector<1x1024xf32>
    %30 = vector.extract_strided_slice %1 {offsets = [0, 28], sizes = [1, 1024], strides = [1, 1]} : vector<1x1152xf32> to vector<1x1024xf32>
    %31 = vector.extract_strided_slice %1 {offsets = [0, 29], sizes = [1, 1024], strides = [1, 1]} : vector<1x1152xf32> to vector<1x1024xf32>
    %32 = vector.extract_strided_slice %1 {offsets = [0, 30], sizes = [1, 1024], strides = [1, 1]} : vector<1x1152xf32> to vector<1x1024xf32>
    %33 = vector.extract_strided_slice %1 {offsets = [0, 31], sizes = [1, 1024], strides = [1, 1]} : vector<1x1152xf32> to vector<1x1024xf32>
    %34 = vector.extract_strided_slice %1 {offsets = [0, 32], sizes = [1, 1024], strides = [1, 1]} : vector<1x1152xf32> to vector<1x1024xf32>
    %35 = vector.extract_strided_slice %1 {offsets = [0, 33], sizes = [1, 1024], strides = [1, 1]} : vector<1x1152xf32> to vector<1x1024xf32>
    %36 = vector.extract_strided_slice %1 {offsets = [0, 34], sizes = [1, 1024], strides = [1, 1]} : vector<1x1152xf32> to vector<1x1024xf32>
    %37 = vector.extract_strided_slice %1 {offsets = [0, 35], sizes = [1, 1024], strides = [1, 1]} : vector<1x1152xf32> to vector<1x1024xf32>
    %38 = vector.extract_strided_slice %1 {offsets = [0, 36], sizes = [1, 1024], strides = [1, 1]} : vector<1x1152xf32> to vector<1x1024xf32>
    %39 = vector.extract_strided_slice %1 {offsets = [0, 37], sizes = [1, 1024], strides = [1, 1]} : vector<1x1152xf32> to vector<1x1024xf32>
    %40 = vector.extract_strided_slice %1 {offsets = [0, 38], sizes = [1, 1024], strides = [1, 1]} : vector<1x1152xf32> to vector<1x1024xf32>
    %41 = vector.extract_strided_slice %1 {offsets = [0, 39], sizes = [1, 1024], strides = [1, 1]} : vector<1x1152xf32> to vector<1x1024xf32>
    %42 = vector.extract_strided_slice %1 {offsets = [0, 40], sizes = [1, 1024], strides = [1, 1]} : vector<1x1152xf32> to vector<1x1024xf32>
    %43 = vector.extract_strided_slice %1 {offsets = [0, 41], sizes = [1, 1024], strides = [1, 1]} : vector<1x1152xf32> to vector<1x1024xf32>
    %44 = vector.extract_strided_slice %1 {offsets = [0, 42], sizes = [1, 1024], strides = [1, 1]} : vector<1x1152xf32> to vector<1x1024xf32>
    %45 = vector.extract_strided_slice %1 {offsets = [0, 43], sizes = [1, 1024], strides = [1, 1]} : vector<1x1152xf32> to vector<1x1024xf32>
    %46 = vector.extract_strided_slice %1 {offsets = [0, 44], sizes = [1, 1024], strides = [1, 1]} : vector<1x1152xf32> to vector<1x1024xf32>
    %47 = vector.extract_strided_slice %1 {offsets = [0, 45], sizes = [1, 1024], strides = [1, 1]} : vector<1x1152xf32> to vector<1x1024xf32>
    %48 = vector.extract_strided_slice %1 {offsets = [0, 46], sizes = [1, 1024], strides = [1, 1]} : vector<1x1152xf32> to vector<1x1024xf32>
    %49 = vector.extract_strided_slice %1 {offsets = [0, 47], sizes = [1, 1024], strides = [1, 1]} : vector<1x1152xf32> to vector<1x1024xf32>
    %50 = vector.extract_strided_slice %1 {offsets = [0, 48], sizes = [1, 1024], strides = [1, 1]} : vector<1x1152xf32> to vector<1x1024xf32>
    %51 = vector.extract_strided_slice %1 {offsets = [0, 49], sizes = [1, 1024], strides = [1, 1]} : vector<1x1152xf32> to vector<1x1024xf32>
    %52 = vector.extract_strided_slice %1 {offsets = [0, 50], sizes = [1, 1024], strides = [1, 1]} : vector<1x1152xf32> to vector<1x1024xf32>
    %53 = vector.extract_strided_slice %1 {offsets = [0, 51], sizes = [1, 1024], strides = [1, 1]} : vector<1x1152xf32> to vector<1x1024xf32>
    %54 = vector.extract_strided_slice %1 {offsets = [0, 52], sizes = [1, 1024], strides = [1, 1]} : vector<1x1152xf32> to vector<1x1024xf32>
    %55 = vector.extract_strided_slice %1 {offsets = [0, 53], sizes = [1, 1024], strides = [1, 1]} : vector<1x1152xf32> to vector<1x1024xf32>
    %56 = vector.extract_strided_slice %1 {offsets = [0, 54], sizes = [1, 1024], strides = [1, 1]} : vector<1x1152xf32> to vector<1x1024xf32>
    %57 = vector.extract_strided_slice %1 {offsets = [0, 55], sizes = [1, 1024], strides = [1, 1]} : vector<1x1152xf32> to vector<1x1024xf32>
    %58 = vector.extract_strided_slice %1 {offsets = [0, 56], sizes = [1, 1024], strides = [1, 1]} : vector<1x1152xf32> to vector<1x1024xf32>
    %59 = vector.extract_strided_slice %1 {offsets = [0, 57], sizes = [1, 1024], strides = [1, 1]} : vector<1x1152xf32> to vector<1x1024xf32>
    %60 = vector.extract_strided_slice %1 {offsets = [0, 58], sizes = [1, 1024], strides = [1, 1]} : vector<1x1152xf32> to vector<1x1024xf32>
    %61 = vector.extract_strided_slice %1 {offsets = [0, 59], sizes = [1, 1024], strides = [1, 1]} : vector<1x1152xf32> to vector<1x1024xf32>
    %62 = vector.extract_strided_slice %1 {offsets = [0, 60], sizes = [1, 1024], strides = [1, 1]} : vector<1x1152xf32> to vector<1x1024xf32>
    %63 = vector.extract_strided_slice %1 {offsets = [0, 61], sizes = [1, 1024], strides = [1, 1]} : vector<1x1152xf32> to vector<1x1024xf32>
    %64 = vector.extract_strided_slice %1 {offsets = [0, 62], sizes = [1, 1024], strides = [1, 1]} : vector<1x1152xf32> to vector<1x1024xf32>
    %65 = vector.extract_strided_slice %1 {offsets = [0, 63], sizes = [1, 1024], strides = [1, 1]} : vector<1x1152xf32> to vector<1x1024xf32>
    %66 = vector.extract_strided_slice %1 {offsets = [0, 64], sizes = [1, 1024], strides = [1, 1]} : vector<1x1152xf32> to vector<1x1024xf32>
    %67 = vector.extract_strided_slice %1 {offsets = [0, 65], sizes = [1, 1024], strides = [1, 1]} : vector<1x1152xf32> to vector<1x1024xf32>
    %68 = vector.extract_strided_slice %1 {offsets = [0, 66], sizes = [1, 1024], strides = [1, 1]} : vector<1x1152xf32> to vector<1x1024xf32>
    %69 = vector.extract_strided_slice %1 {offsets = [0, 67], sizes = [1, 1024], strides = [1, 1]} : vector<1x1152xf32> to vector<1x1024xf32>
    %70 = vector.extract_strided_slice %1 {offsets = [0, 68], sizes = [1, 1024], strides = [1, 1]} : vector<1x1152xf32> to vector<1x1024xf32>
    %71 = vector.extract_strided_slice %1 {offsets = [0, 69], sizes = [1, 1024], strides = [1, 1]} : vector<1x1152xf32> to vector<1x1024xf32>
    %72 = vector.extract_strided_slice %1 {offsets = [0, 70], sizes = [1, 1024], strides = [1, 1]} : vector<1x1152xf32> to vector<1x1024xf32>
    %73 = vector.extract_strided_slice %1 {offsets = [0, 71], sizes = [1, 1024], strides = [1, 1]} : vector<1x1152xf32> to vector<1x1024xf32>
    %74 = vector.extract_strided_slice %1 {offsets = [0, 72], sizes = [1, 1024], strides = [1, 1]} : vector<1x1152xf32> to vector<1x1024xf32>
    %75 = vector.extract_strided_slice %1 {offsets = [0, 73], sizes = [1, 1024], strides = [1, 1]} : vector<1x1152xf32> to vector<1x1024xf32>
    %76 = vector.extract_strided_slice %1 {offsets = [0, 74], sizes = [1, 1024], strides = [1, 1]} : vector<1x1152xf32> to vector<1x1024xf32>
    %77 = tpu.concatenate %2, %3, %4, %5, %6, %7, %8, %9, %10, %11, %12, %13, %14, %15, %16, %17 in 0 : vector<1x1024xf32>, vector<1x1024xf32>, vector<1x1024xf32>, vector<1x1024xf32>, vector<1x1024xf32>, vector<1x1024xf32>, vector<1x1024xf32>, vector<1x1024xf32>, vector<1x1024xf32>, vector<1x1024xf32>, vector<1x1024xf32>, vector<1x1024xf32>, vector<1x1024xf32>, vector<1x1024xf32>, vector<1x1024xf32>, vector<1x1024xf32> -> vector<16x1024xf32>
    %78 = tpu.concatenate %18, %19, %20, %21, %22, %23, %24, %25, %26, %27, %28, %29, %30, %31, %32, %33 in 0 : vector<1x1024xf32>, vector<1x1024xf32>, vector<1x1024xf32>, vector<1x1024xf32>, vector<1x1024xf32>, vector<1x1024xf32>, vector<1x1024xf32>, vector<1x1024xf32>, vector<1x1024xf32>, vector<1x1024xf32>, vector<1x1024xf32>, vector<1x1024xf32>, vector<1x1024xf32>, vector<1x1024xf32>, vector<1x1024xf32>, vector<1x1024xf32> -> vector<16x1024xf32>
    %79 = tpu.concatenate %34, %35, %36, %37, %38, %39, %40, %41, %42, %43, %44, %45, %46, %47, %48, %49 in 0 : vector<1x1024xf32>, vector<1x1024xf32>, vector<1x1024xf32>, vector<1x1024xf32>, vector<1x1024xf32>, vector<1x1024xf32>, vector<1x1024xf32>, vector<1x1024xf32>, vector<1x1024xf32>, vector<1x1024xf32>, vector<1x1024xf32>, vector<1x1024xf32>, vector<1x1024xf32>, vector<1x1024xf32>, vector<1x1024xf32>, vector<1x1024xf32> -> vector<16x1024xf32>
    %80 = tpu.concatenate %50, %51, %52, %53, %54, %55, %56, %57, %58, %59, %60, %61, %62, %63, %64, %65 in 0 : vector<1x1024xf32>, vector<1x1024xf32>, vector<1x1024xf32>, vector<1x1024xf32>, vector<1x1024xf32>, vector<1x1024xf32>, vector<1x1024xf32>, vector<1x1024xf32>, vector<1x1024xf32>, vector<1x1024xf32>, vector<1x1024xf32>, vector<1x1024xf32>, vector<1x1024xf32>, vector<1x1024xf32>, vector<1x1024xf32>, vector<1x1024xf32> -> vector<16x1024xf32>
    %81 = tpu.concatenate %66, %67, %68, %69, %70, %71, %72, %73, %74, %75, %76 in 0 : vector<1x1024xf32>, vector<1x1024xf32>, vector<1x1024xf32>, vector<1x1024xf32>, vector<1x1024xf32>, vector<1x1024xf32>, vector<1x1024xf32>, vector<1x1024xf32>, vector<1x1024xf32>, vector<1x1024xf32>, vector<1x1024xf32> -> vector<11x1024xf32>
    %82 = tpu.concatenate %77, %78, %79, %80, %81 in 0 : vector<16x1024xf32>, vector<16x1024xf32>, vector<16x1024xf32>, vector<16x1024xf32>, vector<11x1024xf32> -> vector<75x1024xf32>
    %c0_2 = arith.constant 0 : index
    %c0_3 = arith.constant 0 : index
    %83 = vector.load %arg2[%c0_2, %c0_3] : memref<60x75xf32, #tpu.memory_space<vmem>>, vector<60x75xf32>
    %cst = arith.constant dense<0.000000e+00> : vector<60x1024xf32>
    %84 = tpu.matmul %83, %82, %cst {dimension_numbers = #tpu.dot_dimension_numbers<[1], [0], [0], [1], [0, 0, 1, 1], [], []>} : vector<60x75xf32>, vector<75x1024xf32>, vector<60x1024xf32> -> vector<60x1024xf32>
    %c0_4 = arith.constant 0 : index
    %c0_5 = arith.constant 0 : index
    %85 = vector.load %arg3[%c0_4, %c0_5] : memref<60x1xf32, #tpu.memory_space<vmem>>, vector<60x1xf32>
    %86 = vector.broadcast %85 : vector<60x1xf32> to vector<60x1024xf32>
    %87 = arith.addf %84, %86 : vector<60x1024xf32>
    %c0_6 = arith.constant 0 : index
    %c0_7 = arith.constant 0 : index
    %c0_8 = arith.constant 0 : index
    %88 = vector.load %arg4[%c0_6, %c0_7, %c0_8] : memref<1x60x1024xf32, #tpu.memory_space<vmem>>, vector<1x60x1024xf32>
    %89 = vector.shape_cast %88 : vector<1x60x1024xf32> to vector<60x1024xf32>
    %90 = vector.shape_cast %87 : vector<60x1024xf32> to vector<1x60x1024xf32>
    tpu.vector_store %arg4[%c0_6, %c0_7, %c0_8], %90 {strides = array<i32>} : memref<1x60x1024xf32, #tpu.memory_space<vmem>>, vector<1x60x1024xf32>,
    return
  }
  func.func @transform_0(%arg0: i32) -> (i32, i32, i32) {
    %c0_i32 = arith.constant 0 : i32
    %c0_i32_0 = arith.constant 0 : i32
    %c0_i32_1 = arith.constant 0 : i32
    return %arg0, %c0_i32, %c0_i32_0 : i32, i32, i32
  }
  func.func @transform_1(%arg0: i32) -> (i32, i32) {
    %c0_i32 = arith.constant 0 : i32
    %c0_i32_0 = arith.constant 0 : i32
    %c0_i32_1 = arith.constant 0 : i32
    return %c0_i32, %c0_i32_0 : i32, i32
  }
  func.func @transform_2(%arg0: i32) -> (i32, i32) {
    %c0_i32 = arith.constant 0 : i32
    %c0_i32_0 = arith.constant 0 : i32
    %c0_i32_1 = arith.constant 0 : i32
    return %c0_i32, %c0_i32_0 : i32, i32
  }
  func.func @transform_3(%arg0: i32) -> (i32, i32, i32) {
    %c0_i32 = arith.constant 0 : i32
    %c0_i32_0 = arith.constant 0 : i32
    %c0_i32_1 = arith.constant 0 : i32
    return %arg0, %c0_i32, %c0_i32_0 : i32, i32, i32
  }
}

</mosaic_0001>

<llo_original>
// kernel: hs_conv_forward.1
$region0: #{hs_conv_forward.1}
  #allocation0 [shape = 'u32[]', space=smem, size = 0x4, offset = 0x4, fixed_abs, tag = 'smem constant byte address 0x4 - core index']
  #allocation1 [shape = 'u32[144,128]{1,0:T(1,128)}', space=vmem, size = 0x12000, scoped, tag = 'internal scratch']
  %s0 = inlined_call_operand.vmem [shape: f32[2,1,1152], index: 0, kind: input, shape index: {}]
  %s1 = inlined_call_operand.vmem [shape: f32[60,75], index: 1, kind: input, shape index: {}]
  %s2 = inlined_call_operand.vmem [shape: f32[60,1], index: 2, kind: input, shape index: {}]
  %s3 = inlined_call_operand.vmem [shape: f32[2,60,1024], index: 3, kind: output, shape index: {}]
  %s4 = sld [smem:[#allocation0]]
  $region45: #{hs_conv_forward.1} parent=0
    _
  %s6 = ssub.s32 1, %s4
  %s7 = scalar_select 0, %s6, %s4
  loop: start=0, step=1, limit=4
  $region2: #{hs_conv_forward.1} parent=0 // loop_pre_header
    _
  $region3: #{hs_conv_forward.1} parent=0 // loop_header
    %s9 = sphi 0, %s13
    %p10 = scmp.ge.s32.totalorder %s9, 4
    %s19 = sphi 0, %s21
    %s22 = sphi 0, %s19
    %s23 = sphi 0, %s22
    %s39 = sphi 0, %s23
    %s43 = sphi 0, %s43
    %s45 = sphi 0, %s43
    %s46 = sphi 0, %s45
    %s60 = sphi 0, %s46
    %s64 = sphi 0, %s64
    %s66 = sphi 0, %s64
    %s67 = sphi 0, %s66
    %s81 = sphi 0, %s67
    %s87 = sphi 0, %s89
    %s90 = sphi 0, %s87
    %s91 = sphi 0, %s90
    %s107 = sphi 0, %s91
  $region4: #{hs_conv_forward.1} parent=0 // loop_header_branch
    %12 = sbr.rel (%p10) target = $region8
  $region5: #{hs_conv_forward.1} parent=0 // loop_body
    %s14 = ssub.s32 %s9, 1
    %s15 = ssub.s32 %s9, 2
    %s16 = sadd.s32 %s9, 1
    %s17 = ssub.s32 %s9, %s16
    %p18 = scmp.eq.s32.totalorder %s17, 0
    %s20 = sadd.s32 %s19, 1
    %s21 = scalar_select %p18, %s19, %s20
    %p24 = pneg %p18
    %p25 = scmp.eq.s32.totalorder %s9, 1
    %p26 = por %p24, %p25
    %p27 = scmp.ne.s32.totalorder %s19, %s22
    %p28 = scmp.eq.s32.totalorder %s9, 0
    %p29 = por %p27, %p28
    %p30 = scmp.ne.s32.totalorder %s19, %s22
    %p31 = scmp.eq.s32.totalorder %s14, 1
    %p32 = por %p30, %p31
    %p33 = scmp.ne.s32.totalorder %s22, %s23
    %p34 = scmp.eq.s32.totalorder %s14, 0
    %p35 = por %p33, %p34
    %p36 = scmp.ne.s32.totalorder %s22, %s23
    %p37 = scmp.eq.s32.totalorder %s15, 1
    %p38 = por %p36, %p37
    %p40 = scmp.ne.s32.totalorder %s23, %s39
    %p41 = scmp.eq.s32.totalorder %s15, 0
    %p42 = por %p40, %p41
    %s44 = sadd.s32 %s43, 1
    %p47 = scmp.eq.s32.totalorder %s9, 1
    %p48 = scmp.ne.s32.totalorder %s43, %s45
    %p49 = scmp.eq.s32.totalorder %s9, 0
    %p50 = por %p48, %p49
    %p51 = scmp.ne.s32.totalorder %s43, %s45
    %p52 = scmp.eq.s32.totalorder %s14, 1
    %p53 = por %p51, %p52
    %p54 = scmp.ne.s32.totalorder %s45, %s46
    %p55 = scmp.eq.s32.totalorder %s14, 0
    %p56 = por %p54, %p55
    %p57 = scmp.ne.s32.totalorder %s45, %s46
    %p58 = scmp.eq.s32.totalorder %s15, 1
    %p59 = por %p57, %p58
    %p61 = scmp.ne.s32.totalorder %s46, %s60
    %p62 = scmp.eq.s32.totalorder %s15, 0
    %p63 = por %p61, %p62
    %s65 = sadd.s32 %s64, 1
    %p68 = scmp.eq.s32.totalorder %s9, 1
    %p69 = scmp.ne.s32.totalorder %s64, %s66
    %p70 = scmp.eq.s32.totalorder %s9, 0
    %p71 = por %p69, %p70
    %p72 = scmp.ne.s32.totalorder %s64, %s66
    %p73 = scmp.eq.s32.totalorder %s14, 1
    %p74 = por %p72, %p73
    %p75 = scmp.ne.s32.totalorder %s66, %s67
    %p76 = scmp.eq.s32.totalorder %s14, 0
    %p77 = por %p75, %p76
    %p78 = scmp.ne.s32.totalorder %s66, %s67
    %p79 = scmp.eq.s32.totalorder %s15, 1
    %p80 = por %p78, %p79
    %p82 = scmp.ne.s32.totalorder %s67, %s81
    %p83 = scmp.eq.s32.totalorder %s15, 0
    %p84 = por %p82, %p83
    %s85 = ssub.s32 %s9, %s16
    %p86 = scmp.eq.s32.totalorder %s85, 0
    %s88 = sadd.s32 %s87, 1
    %s89 = scalar_select %p86, %s87, %s88
    %p92 = pneg %p86
    %p93 = scmp.eq.s32.totalorder %s9, 1
    %p94 = por %p92, %p93
    %p95 = scmp.ne.s32.totalorder %s87, %s90
    %p96 = scmp.eq.s32.totalorder %s9, 0
    %p97 = por %p95, %p96
    %p98 = scmp.ne.s32.totalorder %s87, %s90
    %p99 = scmp.eq.s32.totalorder %s14, 1
    %p100 = por %p98, %p99
    %p101 = scmp.ne.s32.totalorder %s90, %s91
    %p102 = scmp.eq.s32.totalorder %s14, 0
    %p103 = por %p101, %p102
    %p104 = scmp.ne.s32.totalorder %s90, %s91
    %p105 = scmp.eq.s32.totalorder %s15, 1
    %p106 = por %p104, %p105
    %p108 = scmp.ne.s32.totalorder %s91, %s107
    %p109 = scmp.eq.s32.totalorder %s15, 0
    %p110 = por %p108, %p109
    %p111 = scmp.le.s32.totalorder 1, %s9
    %p112 = scmp.lt.s32.totalorder %s9, 3
    %p113 = pnand %p111, %p112
    %p114 = pneg %p113
    // Predicated region
    $region9: #{hs_conv_forward.1} parent=5 // pred_check
      _
    $region10: #{hs_conv_forward.1} parent=5 // pred_check_branch
      %116 = sbr.rel (%p113) target = $region12
    $region11: #{hs_conv_forward.1} parent=5 // pred_region
      %s117 = ssub.s32 %s9, 1
      // Predicated region
      $region13: #{hs_conv_forward.1} parent=11 // pred_check
        %p118 = pneg %p56
      $region14: #{hs_conv_forward.1} parent=11 // pred_check_branch
        %120 = sbr.rel (%p118) target = $region16
      $region15: #{hs_conv_forward.1} parent=11 // pred_region
        _
      $region16: #{hs_conv_forward.1} parent=11 // pred_fallthru
        _
      // Predicated region
      $region17: #{hs_conv_forward.1} parent=11 // pred_check
        %p121 = pneg %p77
      $region18: #{hs_conv_forward.1} parent=11 // pred_check_branch
        %123 = sbr.rel (%p121) target = $region20
      $region19: #{hs_conv_forward.1} parent=11 // pred_region
        _
      $region20: #{hs_conv_forward.1} parent=11 // pred_fallthru
        _
    $region12: #{hs_conv_forward.1} parent=5 // pred_fallthru
      _
    %p124 = scmp.lt.s32.totalorder %s9, 2
    // Predicated region
    $region21: #{hs_conv_forward.1} parent=5 // pred_check
      %p125 = pneg %p124
    $region22: #{hs_conv_forward.1} parent=5 // pred_check_branch
      %127 = sbr.rel (%p125) target = $region24
    $region23: #{hs_conv_forward.1} parent=5 // pred_region
      // Predicated region
      $region25: #{hs_conv_forward.1} parent=23 // pred_check
        %p128 = pneg %p29
      $region26: #{hs_conv_forward.1} parent=23 // pred_check_branch
        %130 = sbr.rel (%p128) target = $region28
      $region27: #{hs_conv_forward.1} parent=23 // pred_region
        %p131 = scmp.lt.s32.totalorder %s9, 1
        %s132 = scalar_select %p131, %s9, 1
        %s133 = smul.addr %s132, 9
        %s134 = scalar_lea.vmem %s0, %s133
      $region28: #{hs_conv_forward.1} parent=23 // pred_fallthru
        _
    $region24: #{hs_conv_forward.1} parent=5 // pred_fallthru
      _
    %p135 = scmp.le.s32.totalorder 1, %s9
    %p136 = scmp.lt.s32.totalorder %s9, 3
    %p137 = pnand %p135, %p136
    %p138 = pneg %p137
    // Predicated region
    $region29: #{hs_conv_forward.1} parent=5 // pred_check
      _
    $region30: #{hs_conv_forward.1} parent=5 // pred_check_branch
      %140 = sbr.rel (%p137) target = $region32
    $region31: #{hs_conv_forward.1} parent=5 // pred_region
      %s141 = ssub.s32 %s9, 1
      %p142 = scmp.lt.s32.totalorder %s14, 1
      %s143 = scalar_select %p142, %s14, 1
      %s144 = smul.addr %s143, 9
      %s145 = scalar_lea.vmem %s0, %s144
      %p146 = pneg %p35
      %p147 = pneg %p32
      %p148 = pneg %p56
      %p149 = pneg %p53
      %p150 = pneg %p77
      %p151 = pneg %p74
      %p152 = pneg %p103
      %p153 = pneg %p100
      %p154 = scmp.lt.s32.totalorder %s14, 1
      %s155 = scalar_select %p154, %s14, 1
      %s156 = smul.addr %s155, 64
      %s157 = smul.addr %s156, 8
      %s158 = scalar_lea.vmem %s3, %s157
      %p159 = scmp.lt.s32.totalorder %s14, 1
      %s160 = scalar_select %p159, %s14, 1
      %s161 = smul.addr %s160, 9
      %s162 = scalar_lea.vmem %s0, %s161
      %p163 = scmp.lt.s32.totalorder %s14, 1
      %s164 = scalar_select %p163, %s14, 1
      %s165 = smul.addr %s164, 64
      %s166 = smul.addr %s165, 8
      %s167 = scalar_lea.vmem %s3, %s166
      %v168 = vld [vmem:[%s162] sm:$0xff]
      %v169 = vld [vmem:[%s162 + $0x8] sm:$0x1]
      %v171 = vlaneseq
      %v172 = vshrl.u32 %v171, 7
      %v173 = vsub.s32 0, %v172
      %v174 = vrot.slane %v168, %v173
      %v175 = vlaneseq
      %v176 = vshrl.u32 %v175, 7
      %v177 = vsub.s32 1, %v176
      %v178 = vrot.slane %v168, %v177
      %v179 = vlaneseq
      %v180 = vshrl.u32 %v179, 7
      %v181 = vsub.s32 2, %v180
      %v182 = vrot.slane %v168, %v181
      %v183 = vlaneseq
      %v184 = vshrl.u32 %v183, 7
      %v185 = vsub.s32 3, %v184
      %v186 = vrot.slane %v168, %v185
      %v187 = vlaneseq
      %v188 = vshrl.u32 %v187, 7
      %v189 = vsub.s32 4, %v188
      %v190 = vrot.slane %v168, %v189
      %v191 = vlaneseq
      %v192 = vshrl.u32 %v191, 7
      %v193 = vsub.s32 5, %v192
      %v194 = vrot.slane %v168, %v193
      %v195 = vlaneseq
      %v196 = vshrl.u32 %v195, 7
      %v197 = vsub.s32 6, %v196
      %v198 = vrot.slane %v168, %v197
      %v199 = vlaneseq
      %v200 = vshrl.u32 %v199, 7
      %v201 = vsub.s32 7, %v200
      %v202 = vrot.slane %v168, %v201
      %v212 = vlaneseq
      %v213 = vshrl.u32 %v212, 7
      %v214 = vsub.s32 0, %v213
      %v215 = vrot.slane %v169, %v214
      %216 = vrot.lane.b32.xlu0 %v174, 127
      %v217 = vpop.permute.xlu0 %216
      %218 = vrot.lane.b32.xlu0 %v178, 127
      %v219 = vpop.permute.xlu0 %218
      %220 = vrot.lane.b32.xlu0 %v182, 127
      %v221 = vpop.permute.xlu0 %220
      %222 = vrot.lane.b32.xlu0 %v186, 127
      %v223 = vpop.permute.xlu0 %222
      %224 = vrot.lane.b32.xlu0 %v190, 127
      %v225 = vpop.permute.xlu0 %224
      %226 = vrot.lane.b32.xlu0 %v194, 127
      %v227 = vpop.permute.xlu0 %226
      %228 = vrot.lane.b32.xlu0 %v198, 127
      %v229 = vpop.permute.xlu0 %228
      %230 = vrot.lane.b32.xlu0 %v202, 127
      %v231 = vpop.permute.xlu0 %230
      %232 = vrot.lane.b32.xlu0 %v215, 127
      %v233 = vpop.permute.xlu0 %232
      %vm234 = vcmask 1039360
      %v235 = vsel %vm234, %v217, %v219
      %v236 = vsel %vm234, %v219, %v221
      %v237 = vsel %vm234, %v221, %v223
      %v238 = vsel %vm234, %v223, %v225
      %v239 = vsel %vm234, %v225, %v227
      %v240 = vsel %vm234, %v227, %v229
      %v241 = vsel %vm234, %v229, %v231
      %v242 = vsel %vm234, %v231, %v233
      %251 = vrot.lane.b32.xlu0 %v174, 126
      %v252 = vpop.permute.xlu0 %251
      %253 = vrot.lane.b32.xlu0 %v178, 126
      %v254 = vpop.permute.xlu0 %253
      %255 = vrot.lane.b32.xlu0 %v182, 126
      %v256 = vpop.permute.xlu0 %255
      %257 = vrot.lane.b32.xlu0 %v186, 126
      %v258 = vpop.permute.xlu0 %257
      %259 = vrot.lane.b32.xlu0 %v190, 126
      %v260 = vpop.permute.xlu0 %259
      %261 = vrot.lane.b32.xlu0 %v194, 126
      %v262 = vpop.permute.xlu0 %261
      %263 = vrot.lane.b32.xlu0 %v198, 126
      %v264 = vpop.permute.xlu0 %263
      %265 = vrot.lane.b32.xlu0 %v202, 126
      %v266 = vpop.permute.xlu0 %265
      %267 = vrot.lane.b32.xlu0 %v215, 126
      %v268 = vpop.permute.xlu0 %267
      %vm269 = vcmask 1031168
      %v270 = vsel %vm269, %v252, %v254
      %v271 = vsel %vm269, %v254, %v256
      %v272 = vsel %vm269, %v256, %v258
      %v273 = vsel %vm269, %v258, %v260
      %v274 = vsel %vm269, %v260, %v262
      %v275 = vsel %vm269, %v262, %v264
      %v276 = vsel %vm269, %v264, %v266
      %v277 = vsel %vm269, %v266, %v268
      %286 = vrot.lane.b32.xlu0 %v174, 125
      %v287 = vpop.permute.xlu0 %286
      %288 = vrot.lane.b32.xlu0 %v178, 125
      %v289 = vpop.permute.xlu0 %288
      %290 = vrot.lane.b32.xlu0 %v182, 125
      %v291 = vpop.permute.xlu0 %290
      %292 = vrot.lane.b32.xlu0 %v186, 125
      %v293 = vpop.permute.xlu0 %292
      %294 = vrot.lane.b32.xlu0 %v190, 125
      %v295 = vpop.permute.xlu0 %294
      %296 = vrot.lane.b32.xlu0 %v194, 125
      %v297 = vpop.permute.xlu0 %296
      %298 = vrot.lane.b32.xlu0 %v198, 125
      %v299 = vpop.permute.xlu0 %298
      %300 = vrot.lane.b32.xlu0 %v202, 125
      %v301 = vpop.permute.xlu0 %300
      %302 = vrot.lane.b32.xlu0 %v215, 125
      %v303 = vpop.permute.xlu0 %302
      %vm304 = vcmask 1022976
      %v305 = vsel %vm304, %v287, %v289
      %v306 = vsel %vm304, %v289, %v291
      %v307 = vsel %vm304, %v291, %v293
      %v308 = vsel %vm304, %v293, %v295
      %v309 = vsel %vm304, %v295, %v297
      %v310 = vsel %vm304, %v297, %v299
      %v311 = vsel %vm304, %v299, %v301
      %v312 = vsel %vm304, %v301, %v303
      %321 = vrot.lane.b32.xlu0 %v174, 124
      %v322 = vpop.permute.xlu0 %321
      %323 = vrot.lane.b32.xlu0 %v178, 124
      %v324 = vpop.permute.xlu0 %323
      %325 = vrot.lane.b32.xlu0 %v182, 124
      %v326 = vpop.permute.xlu0 %325
      %327 = vrot.lane.b32.xlu0 %v186, 124
      %v328 = vpop.permute.xlu0 %327
      %329 = vrot.lane.b32.xlu0 %v190, 124
      %v330 = vpop.permute.xlu0 %329
      %331 = vrot.lane.b32.xlu0 %v194, 124
      %v332 = vpop.permute.xlu0 %331
      %333 = vrot.lane.b32.xlu0 %v198, 124
      %v334 = vpop.permute.xlu0 %333
      %335 = vrot.lane.b32.xlu0 %v202, 124
      %v336 = vpop.permute.xlu0 %335
      %337 = vrot.lane.b32.xlu0 %v215, 124
      %v338 = vpop.permute.xlu0 %337
      %vm339 = vcmask 1014784
      %v340 = vsel %vm339, %v322, %v324
      %v341 = vsel %vm339, %v324, %v326
      %v342 = vsel %vm339, %v326, %v328
      %v343 = vsel %vm339, %v328, %v330
      %v344 = vsel %vm339, %v330, %v332
      %v345 = vsel %vm339, %v332, %v334
      %v346 = vsel %vm339, %v334, %v336
      %v347 = vsel %vm339, %v336, %v338
      %356 = vrot.lane.b32.xlu0 %v174, 123
      %v357 = vpop.permute.xlu0 %356
      %358 = vrot.lane.b32.xlu0 %v178, 123
      %v359 = vpop.permute.xlu0 %358
      %360 = vrot.lane.b32.xlu0 %v182, 123
      %v361 = vpop.permute.xlu0 %360
      %362 = vrot.lane.b32.xlu0 %v186, 123
      %v363 = vpop.permute.xlu0 %362
      %364 = vrot.lane.b32.xlu0 %v190, 123
      %v365 = vpop.permute.xlu0 %364
      %366 = vrot.lane.b32.xlu0 %v194, 123
      %v367 = vpop.permute.xlu0 %366
      %368 = vrot.lane.b32.xlu0 %v198, 123
      %v369 = vpop.permute.xlu0 %368
      %370 = vrot.lane.b32.xlu0 %v202, 123
      %v371 = vpop.permute.xlu0 %370
      %372 = vrot.lane.b32.xlu0 %v215, 123
      %v373 = vpop.permute.xlu0 %372
      %vm374 = vcmask 1006592
      %v375 = vsel %vm374, %v357, %v359
      %v376 = vsel %vm374, %v359, %v361
      %v377 = vsel %vm374, %v361, %v363
      %v378 = vsel %vm374, %v363, %v365
      %v379 = vsel %vm374, %v365, %v367
      %v380 = vsel %vm374, %v367, %v369
      %v381 = vsel %vm374, %v369, %v371
      %v382 = vsel %vm374, %v371, %v373
      %391 = vrot.lane.b32.xlu0 %v174, 122
      %v392 = vpop.permute.xlu0 %391
      %393 = vrot.lane.b32.xlu0 %v178, 122
      %v394 = vpop.permute.xlu0 %393
      %395 = vrot.lane.b32.xlu0 %v182, 122
      %v396 = vpop.permute.xlu0 %395
      %397 = vrot.lane.b32.xlu0 %v186, 122
      %v398 = vpop.permute.xlu0 %397
      %399 = vrot.lane.b32.xlu0 %v190, 122
      %v400 = vpop.permute.xlu0 %399
      %401 = vrot.lane.b32.xlu0 %v194, 122
      %v402 = vpop.permute.xlu0 %401
      %403 = vrot.lane.b32.xlu0 %v198, 122
      %v404 = vpop.permute.xlu0 %403
      %405 = vrot.lane.b32.xlu0 %v202, 122
      %v406 = vpop.permute.xlu0 %405
      %407 = vrot.lane.b32.xlu0 %v215, 122
      %v408 = vpop.permute.xlu0 %407
      %vm409 = vcmask 998400
      %v410 = vsel %vm409, %v392, %v394
      %v411 = vsel %vm409, %v394, %v396
      %v412 = vsel %vm409, %v396, %v398
      %v413 = vsel %vm409, %v398, %v400
      %v414 = vsel %vm409, %v400, %v402
      %v415 = vsel %vm409, %v402, %v404
      %v416 = vsel %vm409, %v404, %v406
      %v417 = vsel %vm409, %v406, %v408
      %426 = vrot.lane.b32.xlu0 %v174, 121
      %v427 = vpop.permute.xlu0 %426
      %428 = vrot.lane.b32.xlu0 %v178, 121
      %v429 = vpop.permute.xlu0 %428
      %430 = vrot.lane.b32.xlu0 %v182, 121
      %v431 = vpop.permute.xlu0 %430
      %432 = vrot.lane.b32.xlu0 %v186, 121
      %v433 = vpop.permute.xlu0 %432
      %434 = vrot.lane.b32.xlu0 %v190, 121
      %v435 = vpop.permute.xlu0 %434
      %436 = vrot.lane.b32.xlu0 %v194, 121
      %v437 = vpop.permute.xlu0 %436
      %438 = vrot.lane.b32.xlu0 %v198, 121
      %v439 = vpop.permute.xlu0 %438
      %440 = vrot.lane.b32.xlu0 %v202, 121
      %v441 = vpop.permute.xlu0 %440
      %442 = vrot.lane.b32.xlu0 %v215, 121
      %v443 = vpop.permute.xlu0 %442
      %vm444 = vcmask 990208
      %v445 = vsel %vm444, %v427, %v429
      %v446 = vsel %vm444, %v429, %v431
      %v447 = vsel %vm444, %v431, %v433
      %v448 = vsel %vm444, %v433, %v435
      %v449 = vsel %vm444, %v435, %v437
      %v450 = vsel %vm444, %v437, %v439
      %v451 = vsel %vm444, %v439, %v441
      %v452 = vsel %vm444, %v441, %v443
      %461 = vrot.lane.b32.xlu0 %v174, 120
      %v462 = vpop.permute.xlu0 %461
      %463 = vrot.lane.b32.xlu0 %v178, 120
      %v464 = vpop.permute.xlu0 %463
      %465 = vrot.lane.b32.xlu0 %v182, 120
      %v466 = vpop.permute.xlu0 %465
      %467 = vrot.lane.b32.xlu0 %v186, 120
      %v468 = vpop.permute.xlu0 %467
      %469 = vrot.lane.b32.xlu0 %v190, 120
      %v470 = vpop.permute.xlu0 %469
      %471 = vrot.lane.b32.xlu0 %v194, 120
      %v472 = vpop.permute.xlu0 %471
      %473 = vrot.lane.b32.xlu0 %v198, 120
      %v474 = vpop.permute.xlu0 %473
      %475 = vrot.lane.b32.xlu0 %v202, 120
      %v476 = vpop.permute.xlu0 %475
      %477 = vrot.lane.b32.xlu0 %v215, 120
      %v478 = vpop.permute.xlu0 %477
      %vm479 = vcmask 982016
      %v480 = vsel %vm479, %v462, %v464
      %v481 = vsel %vm479, %v464, %v466
      %v482 = vsel %vm479, %v466, %v468
      %v483 = vsel %vm479, %v468, %v470
      %v484 = vsel %vm479, %v470, %v472
      %v485 = vsel %vm479, %v472, %v474
      %v486 = vsel %vm479, %v474, %v476
      %v487 = vsel %vm479, %v476, %v478
      %496 = vrot.lane.b32.xlu0 %v174, 119
      %v497 = vpop.permute.xlu0 %496
      %498 = vrot.lane.b32.xlu0 %v178, 119
      %v499 = vpop.permute.xlu0 %498
      %500 = vrot.lane.b32.xlu0 %v182, 119
      %v501 = vpop.permute.xlu0 %500
      %502 = vrot.lane.b32.xlu0 %v186, 119
      %v503 = vpop.permute.xlu0 %502
      %504 = vrot.lane.b32.xlu0 %v190, 119
      %v505 = vpop.permute.xlu0 %504
      %506 = vrot.lane.b32.xlu0 %v194, 119
      %v507 = vpop.permute.xlu0 %506
      %508 = vrot.lane.b32.xlu0 %v198, 119
      %v509 = vpop.permute.xlu0 %508
      %510 = vrot.lane.b32.xlu0 %v202, 119
      %v511 = vpop.permute.xlu0 %510
      %512 = vrot.lane.b32.xlu0 %v215, 119
      %v513 = vpop.permute.xlu0 %512
      %vm514 = vcmask 973824
      %v515 = vsel %vm514, %v497, %v499
      %v516 = vsel %vm514, %v499, %v501
      %v517 = vsel %vm514, %v501, %v503
      %v518 = vsel %vm514, %v503, %v505
      %v519 = vsel %vm514, %v505, %v507
      %v520 = vsel %vm514, %v507, %v509
      %v521 = vsel %vm514, %v509, %v511
      %v522 = vsel %vm514, %v511, %v513
      %531 = vrot.lane.b32.xlu0 %v174, 118
      %v532 = vpop.permute.xlu0 %531
      %533 = vrot.lane.b32.xlu0 %v178, 118
      %v534 = vpop.permute.xlu0 %533
      %535 = vrot.lane.b32.xlu0 %v182, 118
      %v536 = vpop.permute.xlu0 %535
      %537 = vrot.lane.b32.xlu0 %v186, 118
      %v538 = vpop.permute.xlu0 %537
      %539 = vrot.lane.b32.xlu0 %v190, 118
      %v540 = vpop.permute.xlu0 %539
      %541 = vrot.lane.b32.xlu0 %v194, 118
      %v542 = vpop.permute.xlu0 %541
      %543 = vrot.lane.b32.xlu0 %v198, 118
      %v544 = vpop.permute.xlu0 %543
      %545 = vrot.lane.b32.xlu0 %v202, 118
      %v546 = vpop.permute.xlu0 %545
      %547 = vrot.lane.b32.xlu0 %v215, 118
      %v548 = vpop.permute.xlu0 %547
      %vm549 = vcmask 965632
      %v550 = vsel %vm549, %v532, %v534
      %v551 = vsel %vm549, %v534, %v536
      %v552 = vsel %vm549, %v536, %v538
      %v553 = vsel %vm549, %v538, %v540
      %v554 = vsel %vm549, %v540, %v542
      %v555 = vsel %vm549, %v542, %v544
      %v556 = vsel %vm549, %v544, %v546
      %v557 = vsel %vm549, %v546, %v548
      %566 = vrot.lane.b32.xlu0 %v174, 117
      %v567 = vpop.permute.xlu0 %566
      %568 = vrot.lane.b32.xlu0 %v178, 117
      %v569 = vpop.permute.xlu0 %568
      %570 = vrot.lane.b32.xlu0 %v182, 117
      %v571 = vpop.permute.xlu0 %570
      %572 = vrot.lane.b32.xlu0 %v186, 117
      %v573 = vpop.permute.xlu0 %572
      %574 = vrot.lane.b32.xlu0 %v190, 117
      %v575 = vpop.permute.xlu0 %574
      %576 = vrot.lane.b32.xlu0 %v194, 117
      %v577 = vpop.permute.xlu0 %576
      %578 = vrot.lane.b32.xlu0 %v198, 117
      %v579 = vpop.permute.xlu0 %578
      %580 = vrot.lane.b32.xlu0 %v202, 117
      %v581 = vpop.permute.xlu0 %580
      %582 = vrot.lane.b32.xlu0 %v215, 117
      %v583 = vpop.permute.xlu0 %582
      %vm584 = vcmask 957440
      %v585 = vsel %vm584, %v567, %v569
      %v586 = vsel %vm584, %v569, %v571
      %v587 = vsel %vm584, %v571, %v573
      %v588 = vsel %vm584, %v573, %v575
      %v589 = vsel %vm584, %v575, %v577
      %v590 = vsel %vm584, %v577, %v579
      %v591 = vsel %vm584, %v579, %v581
      %v592 = vsel %vm584, %v581, %v583
      %601 = vrot.lane.b32.xlu0 %v174, 116
      %v602 = vpop.permute.xlu0 %601
      %603 = vrot.lane.b32.xlu0 %v178, 116
      %v604 = vpop.permute.xlu0 %603
      %605 = vrot.lane.b32.xlu0 %v182, 116
      %v606 = vpop.permute.xlu0 %605
      %607 = vrot.lane.b32.xlu0 %v186, 116
      %v608 = vpop.permute.xlu0 %607
      %609 = vrot.lane.b32.xlu0 %v190, 116
      %v610 = vpop.permute.xlu0 %609
      %611 = vrot.lane.b32.xlu0 %v194, 116
      %v612 = vpop.permute.xlu0 %611
      %613 = vrot.lane.b32.xlu0 %v198, 116
      %v614 = vpop.permute.xlu0 %613
      %615 = vrot.lane.b32.xlu0 %v202, 116
      %v616 = vpop.permute.xlu0 %615
      %617 = vrot.lane.b32.xlu0 %v215, 116
      %v618 = vpop.permute.xlu0 %617
      %vm619 = vcmask 949248
      %v620 = vsel %vm619, %v602, %v604
      %v621 = vsel %vm619, %v604, %v606
      %v622 = vsel %vm619, %v606, %v608
      %v623 = vsel %vm619, %v608, %v610
      %v624 = vsel %vm619, %v610, %v612
      %v625 = vsel %vm619, %v612, %v614
      %v626 = vsel %vm619, %v614, %v616
      %v627 = vsel %vm619, %v616, %v618
      %636 = vrot.lane.b32.xlu0 %v174, 115
      %v637 = vpop.permute.xlu0 %636
      %638 = vrot.lane.b32.xlu0 %v178, 115
      %v639 = vpop.permute.xlu0 %638
      %640 = vrot.lane.b32.xlu0 %v182, 115
      %v641 = vpop.permute.xlu0 %640
      %642 = vrot.lane.b32.xlu0 %v186, 115
      %v643 = vpop.permute.xlu0 %642
      %644 = vrot.lane.b32.xlu0 %v190, 115
      %v645 = vpop.permute.xlu0 %644
      %646 = vrot.lane.b32.xlu0 %v194, 115
      %v647 = vpop.permute.xlu0 %646
      %648 = vrot.lane.b32.xlu0 %v198, 115
      %v649 = vpop.permute.xlu0 %648
      %650 = vrot.lane.b32.xlu0 %v202, 115
      %v651 = vpop.permute.xlu0 %650
      %652 = vrot.lane.b32.xlu0 %v215, 115
      %v653 = vpop.permute.xlu0 %652
      %vm654 = vcmask 941056
      %v655 = vsel %vm654, %v637, %v639
      %v656 = vsel %vm654, %v639, %v641
      %v657 = vsel %vm654, %v641, %v643
      %v658 = vsel %vm654, %v643, %v645
      %v659 = vsel %vm654, %v645, %v647
      %v660 = vsel %vm654, %v647, %v649
      %v661 = vsel %vm654, %v649, %v651
      %v662 = vsel %vm654, %v651, %v653
      %671 = vrot.lane.b32.xlu0 %v174, 114
      %v672 = vpop.permute.xlu0 %671
      %673 = vrot.lane.b32.xlu0 %v178, 114
      %v674 = vpop.permute.xlu0 %673
      %675 = vrot.lane.b32.xlu0 %v182, 114
      %v676 = vpop.permute.xlu0 %675
      %677 = vrot.lane.b32.xlu0 %v186, 114
      %v678 = vpop.permute.xlu0 %677
      %679 = vrot.lane.b32.xlu0 %v190, 114
      %v680 = vpop.permute.xlu0 %679
      %681 = vrot.lane.b32.xlu0 %v194, 114
      %v682 = vpop.permute.xlu0 %681
      %683 = vrot.lane.b32.xlu0 %v198, 114
      %v684 = vpop.permute.xlu0 %683
      %685 = vrot.lane.b32.xlu0 %v202, 114
      %v686 = vpop.permute.xlu0 %685
      %687 = vrot.lane.b32.xlu0 %v215, 114
      %v688 = vpop.permute.xlu0 %687
      %vm689 = vcmask 932864
      %v690 = vsel %vm689, %v672, %v674
      %v691 = vsel %vm689, %v674, %v676
      %v692 = vsel %vm689, %v676, %v678
      %v693 = vsel %vm689, %v678, %v680
      %v694 = vsel %vm689, %v680, %v682
      %v695 = vsel %vm689, %v682, %v684
      %v696 = vsel %vm689, %v684, %v686
      %v697 = vsel %vm689, %v686, %v688
      %706 = vrot.lane.b32.xlu0 %v174, 113
      %v707 = vpop.permute.xlu0 %706
      %708 = vrot.lane.b32.xlu0 %v178, 113
      %v709 = vpop.permute.xlu0 %708
      %710 = vrot.lane.b32.xlu0 %v182, 113
      %v711 = vpop.permute.xlu0 %710
      %712 = vrot.lane.b32.xlu0 %v186, 113
      %v713 = vpop.permute.xlu0 %712
      %714 = vrot.lane.b32.xlu0 %v190, 113
      %v715 = vpop.permute.xlu0 %714
      %716 = vrot.lane.b32.xlu0 %v194, 113
      %v717 = vpop.permute.xlu0 %716
      %718 = vrot.lane.b32.xlu0 %v198, 113
      %v719 = vpop.permute.xlu0 %718
      %720 = vrot.lane.b32.xlu0 %v202, 113
      %v721 = vpop.permute.xlu0 %720
      %722 = vrot.lane.b32.xlu0 %v215, 113
      %v723 = vpop.permute.xlu0 %722
      %vm724 = vcmask 924672
      %v725 = vsel %vm724, %v707, %v709
      %v726 = vsel %vm724, %v709, %v711
      %v727 = vsel %vm724, %v711, %v713
      %v728 = vsel %vm724, %v713, %v715
      %v729 = vsel %vm724, %v715, %v717
      %v730 = vsel %vm724, %v717, %v719
      %v731 = vsel %vm724, %v719, %v721
      %v732 = vsel %vm724, %v721, %v723
      %vm741 = vcmask 1040384
      %v742 = vsel %vm741, %v174, %v235
      %v743 = vsel %vm741, %v178, %v236
      %v744 = vsel %vm741, %v182, %v237
      %v745 = vsel %vm741, %v186, %v238
      %v746 = vsel %vm741, %v190, %v239
      %v747 = vsel %vm741, %v194, %v240
      %v748 = vsel %vm741, %v198, %v241
      %v749 = vsel %vm741, %v202, %v242
      %vm750 = vcmask 1041408
      %v751 = vsel %vm750, %v742, %v270
      %v752 = vsel %vm750, %v743, %v271
      %v753 = vsel %vm750, %v744, %v272
      %v754 = vsel %vm750, %v745, %v273
      %v755 = vsel %vm750, %v746, %v274
      %v756 = vsel %vm750, %v747, %v275
      %v757 = vsel %vm750, %v748, %v276
      %v758 = vsel %vm750, %v749, %v277
      %vm759 = vcmask 1042432
      %v760 = vsel %vm759, %v751, %v305
      %v761 = vsel %vm759, %v752, %v306
      %v762 = vsel %vm759, %v753, %v307
      %v763 = vsel %vm759, %v754, %v308
      %v764 = vsel %vm759, %v755, %v309
      %v765 = vsel %vm759, %v756, %v310
      %v766 = vsel %vm759, %v757, %v311
      %v767 = vsel %vm759, %v758, %v312
      %vm768 = vcmask 1043456
      %v769 = vsel %vm768, %v760, %v340
      %v770 = vsel %vm768, %v761, %v341
      %v771 = vsel %vm768, %v762, %v342
      %v772 = vsel %vm768, %v763, %v343
      %v773 = vsel %vm768, %v764, %v344
      %v774 = vsel %vm768, %v765, %v345
      %v775 = vsel %vm768, %v766, %v346
      %v776 = vsel %vm768, %v767, %v347
      %vm777 = vcmask 1044480
      %v778 = vsel %vm777, %v769, %v375
      %v779 = vsel %vm777, %v770, %v376
      %v780 = vsel %vm777, %v771, %v377
      %v781 = vsel %vm777, %v772, %v378
      %v782 = vsel %vm777, %v773, %v379
      %v783 = vsel %vm777, %v774, %v380
      %v784 = vsel %vm777, %v775, %v381
      %v785 = vsel %vm777, %v776, %v382
      %vm786 = vcmask 1045504
      %v787 = vsel %vm786, %v778, %v410
      %v788 = vsel %vm786, %v779, %v411
      %v789 = vsel %vm786, %v780, %v412
      %v790 = vsel %vm786, %v781, %v413
      %v791 = vsel %vm786, %v782, %v414
      %v792 = vsel %vm786, %v783, %v415
      %v793 = vsel %vm786, %v784, %v416
      %v794 = vsel %vm786, %v785, %v417
      %vm795 = vcmask 1046528
      %v796 = vsel %vm795, %v787, %v445
      %v797 = vsel %vm795, %v788, %v446
      %v798 = vsel %vm795, %v789, %v447
      %v799 = vsel %vm795, %v790, %v448
      %v800 = vsel %vm795, %v791, %v449
      %v801 = vsel %vm795, %v792, %v450
      %v802 = vsel %vm795, %v793, %v451
      %v803 = vsel %vm795, %v794, %v452
      %v804 = vsel %vm741, %v480, %v515
      %v805 = vsel %vm741, %v481, %v516
      %v806 = vsel %vm741, %v482, %v517
      %v807 = vsel %vm741, %v483, %v518
      %v808 = vsel %vm741, %v484, %v519
      %v809 = vsel %vm741, %v485, %v520
      %v810 = vsel %vm741, %v486, %v521
      %v811 = vsel %vm741, %v487, %v522
      %v812 = vsel %vm750, %v804, %v550
      %v813 = vsel %vm750, %v805, %v551
      %v814 = vsel %vm750, %v806, %v552
      %v815 = vsel %vm750, %v807, %v553
      %v816 = vsel %vm750, %v808, %v554
      %v817 = vsel %vm750, %v809, %v555
      %v818 = vsel %vm750, %v810, %v556
      %v819 = vsel %vm750, %v811, %v557
      %v820 = vsel %vm759, %v812, %v585
      %v821 = vsel %vm759, %v813, %v586
      %v822 = vsel %vm759, %v814, %v587
      %v823 = vsel %vm759, %v815, %v588
      %v824 = vsel %vm759, %v816, %v589
      %v825 = vsel %vm759, %v817, %v590
      %v826 = vsel %vm759, %v818, %v591
      %v827 = vsel %vm759, %v819, %v592
      %v828 = vsel %vm768, %v820, %v620
      %v829 = vsel %vm768, %v821, %v621
      %v830 = vsel %vm768, %v822, %v622
      %v831 = vsel %vm768, %v823, %v623
      %v832 = vsel %vm768, %v824, %v624
      %v833 = vsel %vm768, %v825, %v625
      %v834 = vsel %vm768, %v826, %v626
      %v835 = vsel %vm768, %v827, %v627
      %v836 = vsel %vm777, %v828, %v655
      %v837 = vsel %vm777, %v829, %v656
      %v838 = vsel %vm777, %v830, %v657
      %v839 = vsel %vm777, %v831, %v658
      %v840 = vsel %vm777, %v832, %v659
      %v841 = vsel %vm777, %v833, %v660
      %v842 = vsel %vm777, %v834, %v661
      %v843 = vsel %vm777, %v835, %v662
      %v844 = vsel %vm786, %v836, %v690
      %v845 = vsel %vm786, %v837, %v691
      %v846 = vsel %vm786, %v838, %v692
      %v847 = vsel %vm786, %v839, %v693
      %v848 = vsel %vm786, %v840, %v694
      %v849 = vsel %vm786, %v841, %v695
      %v850 = vsel %vm786, %v842, %v696
      %v851 = vsel %vm786, %v843, %v697
      %v852 = vsel %vm795, %v844, %v725
      %v853 = vsel %vm795, %v845, %v726
      %v854 = vsel %vm795, %v846, %v727
      %v855 = vsel %vm795, %v847, %v728
      %v856 = vsel %vm795, %v848, %v729
      %v857 = vsel %vm795, %v849, %v730
      %v858 = vsel %vm795, %v850, %v731
      %v859 = vsel %vm795, %v851, %v732
      %v876 = vsel %vm741, %v215, %v233
      %v877 = vsel %vm750, %v876, %v268
      %v878 = vsel %vm759, %v877, %v303
      %v879 = vsel %vm768, %v878, %v338
      %v880 = vsel %vm777, %v879, %v373
      %v881 = vsel %vm786, %v880, %v408
      %v882 = vsel %vm795, %v881, %v443
      %v883 = vsel %vm741, %v478, %v513
      %v884 = vsel %vm750, %v883, %v548
      %v885 = vsel %vm759, %v884, %v583
      %v886 = vsel %vm768, %v885, %v618
      %v887 = vsel %vm777, %v886, %v653
      %v888 = vsel %vm786, %v887, %v688
      %v889 = vsel %vm795, %v888, %v723
      %908 = vrot.lane.b32.xlu0 %v796, 112
      %v909 = vpop.permute.xlu0 %908
      %910 = vrot.lane.b32.xlu0 %v797, 112
      %v911 = vpop.permute.xlu0 %910
      %912 = vrot.lane.b32.xlu0 %v798, 112
      %v913 = vpop.permute.xlu0 %912
      %914 = vrot.lane.b32.xlu0 %v799, 112
      %v915 = vpop.permute.xlu0 %914
      %916 = vrot.lane.b32.xlu0 %v800, 112
      %v917 = vpop.permute.xlu0 %916
      %918 = vrot.lane.b32.xlu0 %v801, 112
      %v919 = vpop.permute.xlu0 %918
      %920 = vrot.lane.b32.xlu0 %v802, 112
      %v921 = vpop.permute.xlu0 %920
      %922 = vrot.lane.b32.xlu0 %v803, 112
      %v923 = vpop.permute.xlu0 %922
      %924 = vrot.lane.b32.xlu0 %v882, 112
      %v925 = vpop.permute.xlu0 %924
      %926 = vrot.lane.b32.xlu0 %v852, 112
      %v927 = vpop.permute.xlu0 %926
      %928 = vrot.lane.b32.xlu0 %v853, 112
      %v929 = vpop.permute.xlu0 %928
      %930 = vrot.lane.b32.xlu0 %v854, 112
      %v931 = vpop.permute.xlu0 %930
      %932 = vrot.lane.b32.xlu0 %v855, 112
      %v933 = vpop.permute.xlu0 %932
      %934 = vrot.lane.b32.xlu0 %v856, 112
      %v935 = vpop.permute.xlu0 %934
      %936 = vrot.lane.b32.xlu0 %v857, 112
      %v937 = vpop.permute.xlu0 %936
      %938 = vrot.lane.b32.xlu0 %v858, 112
      %v939 = vpop.permute.xlu0 %938
      %940 = vrot.lane.b32.xlu0 %v859, 112
      %v941 = vpop.permute.xlu0 %940
      %942 = vrot.lane.b32.xlu0 %v889, 112
      %v943 = vpop.permute.xlu0 %942
      %vm944 = vcmask 916480
      %v945 = vsel %vm944, %v909, %v911
      %v946 = vsel %vm944, %v911, %v913
      %v947 = vsel %vm944, %v913, %v915
      %v948 = vsel %vm944, %v915, %v917
      %v949 = vsel %vm944, %v917, %v919
      %v950 = vsel %vm944, %v919, %v921
      %v951 = vsel %vm944, %v921, %v923
      %v952 = vsel %vm944, %v923, %v925
      %v953 = vsel %vm944, %v927, %v929
      %v954 = vsel %vm944, %v929, %v931
      %v955 = vsel %vm944, %v931, %v933
      %v956 = vsel %vm944, %v933, %v935
      %v957 = vsel %vm944, %v935, %v937
      %v958 = vsel %vm944, %v937, %v939
      %v959 = vsel %vm944, %v939, %v941
      %v960 = vsel %vm944, %v941, %v943
      %977 = vrot.lane.b32.xlu0 %v796, 96
      %v978 = vpop.permute.xlu0 %977
      %979 = vrot.lane.b32.xlu0 %v797, 96
      %v980 = vpop.permute.xlu0 %979
      %981 = vrot.lane.b32.xlu0 %v798, 96
      %v982 = vpop.permute.xlu0 %981
      %983 = vrot.lane.b32.xlu0 %v799, 96
      %v984 = vpop.permute.xlu0 %983
      %985 = vrot.lane.b32.xlu0 %v800, 96
      %v986 = vpop.permute.xlu0 %985
      %987 = vrot.lane.b32.xlu0 %v801, 96
      %v988 = vpop.permute.xlu0 %987
      %989 = vrot.lane.b32.xlu0 %v802, 96
      %v990 = vpop.permute.xlu0 %989
      %991 = vrot.lane.b32.xlu0 %v803, 96
      %v992 = vpop.permute.xlu0 %991
      %993 = vrot.lane.b32.xlu0 %v882, 96
      %v994 = vpop.permute.xlu0 %993
      %995 = vrot.lane.b32.xlu0 %v852, 96
      %v996 = vpop.permute.xlu0 %995
      %997 = vrot.lane.b32.xlu0 %v853, 96
      %v998 = vpop.permute.xlu0 %997
      %999 = vrot.lane.b32.xlu0 %v854, 96
      %v1000 = vpop.permute.xlu0 %999
      %1001 = vrot.lane.b32.xlu0 %v855, 96
      %v1002 = vpop.permute.xlu0 %1001
      %1003 = vrot.lane.b32.xlu0 %v856, 96
      %v1004 = vpop.permute.xlu0 %1003
      %1005 = vrot.lane.b32.xlu0 %v857, 96
      %v1006 = vpop.permute.xlu0 %1005
      %1007 = vrot.lane.b32.xlu0 %v858, 96
      %v1008 = vpop.permute.xlu0 %1007
      %1009 = vrot.lane.b32.xlu0 %v859, 96
      %v1010 = vpop.permute.xlu0 %1009
      %1011 = vrot.lane.b32.xlu0 %v889, 96
      %v1012 = vpop.permute.xlu0 %1011
      %vm1013 = vcmask 785408
      %v1014 = vsel %vm1013, %v978, %v980
      %v1015 = vsel %vm1013, %v980, %v982
      %v1016 = vsel %vm1013, %v982, %v984
      %v1017 = vsel %vm1013, %v984, %v986
      %v1018 = vsel %vm1013, %v986, %v988
      %v1019 = vsel %vm1013, %v988, %v990
      %v1020 = vsel %vm1013, %v990, %v992
      %v1021 = vsel %vm1013, %v992, %v994
      %v1022 = vsel %vm1013, %v996, %v998
      %v1023 = vsel %vm1013, %v998, %v1000
      %v1024 = vsel %vm1013, %v1000, %v1002
      %v1025 = vsel %vm1013, %v1002, %v1004
      %v1026 = vsel %vm1013, %v1004, %v1006
      %v1027 = vsel %vm1013, %v1006, %v1008
      %v1028 = vsel %vm1013, %v1008, %v1010
      %v1029 = vsel %vm1013, %v1010, %v1012
      %1046 = vrot.lane.b32.xlu0 %v796, 80
      %v1047 = vpop.permute.xlu0 %1046
      %1048 = vrot.lane.b32.xlu0 %v797, 80
      %v1049 = vpop.permute.xlu0 %1048
      %1050 = vrot.lane.b32.xlu0 %v798, 80
      %v1051 = vpop.permute.xlu0 %1050
      %1052 = vrot.lane.b32.xlu0 %v799, 80
      %v1053 = vpop.permute.xlu0 %1052
      %1054 = vrot.lane.b32.xlu0 %v800, 80
      %v1055 = vpop.permute.xlu0 %1054
      %1056 = vrot.lane.b32.xlu0 %v801, 80
      %v1057 = vpop.permute.xlu0 %1056
      %1058 = vrot.lane.b32.xlu0 %v802, 80
      %v1059 = vpop.permute.xlu0 %1058
      %1060 = vrot.lane.b32.xlu0 %v803, 80
      %v1061 = vpop.permute.xlu0 %1060
      %1062 = vrot.lane.b32.xlu0 %v882, 80
      %v1063 = vpop.permute.xlu0 %1062
      %1064 = vrot.lane.b32.xlu0 %v852, 80
      %v1065 = vpop.permute.xlu0 %1064
      %1066 = vrot.lane.b32.xlu0 %v853, 80
      %v1067 = vpop.permute.xlu0 %1066
      %1068 = vrot.lane.b32.xlu0 %v854, 80
      %v1069 = vpop.permute.xlu0 %1068
      %1070 = vrot.lane.b32.xlu0 %v855, 80
      %v1071 = vpop.permute.xlu0 %1070
      %1072 = vrot.lane.b32.xlu0 %v856, 80
      %v1073 = vpop.permute.xlu0 %1072
      %1074 = vrot.lane.b32.xlu0 %v857, 80
      %v1075 = vpop.permute.xlu0 %1074
      %1076 = vrot.lane.b32.xlu0 %v858, 80
      %v1077 = vpop.permute.xlu0 %1076
      %1078 = vrot.lane.b32.xlu0 %v859, 80
      %v1079 = vpop.permute.xlu0 %1078
      %1080 = vrot.lane.b32.xlu0 %v889, 80
      %v1081 = vpop.permute.xlu0 %1080
      %vm1082 = vcmask 654336
      %v1083 = vsel %vm1082, %v1047, %v1049
      %v1084 = vsel %vm1082, %v1049, %v1051
      %v1085 = vsel %vm1082, %v1051, %v1053
      %v1086 = vsel %vm1082, %v1053, %v1055
      %v1087 = vsel %vm1082, %v1055, %v1057
      %v1088 = vsel %vm1082, %v1057, %v1059
      %v1089 = vsel %vm1082, %v1059, %v1061
      %v1090 = vsel %vm1082, %v1061, %v1063
      %v1091 = vsel %vm1082, %v1065, %v1067
      %v1092 = vsel %vm1082, %v1067, %v1069
      %v1093 = vsel %vm1082, %v1069, %v1071
      %v1094 = vsel %vm1082, %v1071, %v1073
      %v1095 = vsel %vm1082, %v1073, %v1075
      %v1096 = vsel %vm1082, %v1075, %v1077
      %v1097 = vsel %vm1082, %v1077, %v1079
      %v1098 = vsel %vm1082, %v1079, %v1081
      %1124 = vrot.lane.b32.xlu0 %v796, 64
      %v1125 = vpop.permute.xlu0 %1124
      %1126 = vrot.lane.b32.xlu0 %v797, 64
      %v1127 = vpop.permute.xlu0 %1126
      %1128 = vrot.lane.b32.xlu0 %v798, 64
      %v1129 = vpop.permute.xlu0 %1128
      %1130 = vrot.lane.b32.xlu0 %v799, 64
      %v1131 = vpop.permute.xlu0 %1130
      %1132 = vrot.lane.b32.xlu0 %v800, 64
      %v1133 = vpop.permute.xlu0 %1132
      %1134 = vrot.lane.b32.xlu0 %v801, 64
      %v1135 = vpop.permute.xlu0 %1134
      %1136 = vrot.lane.b32.xlu0 %v802, 64
      %v1137 = vpop.permute.xlu0 %1136
      %1138 = vrot.lane.b32.xlu0 %v803, 64
      %v1139 = vpop.permute.xlu0 %1138
      %1140 = vrot.lane.b32.xlu0 %v882, 64
      %v1141 = vpop.permute.xlu0 %1140
      %1142 = vrot.lane.b32.xlu0 %v812, 64
      %v1143 = vpop.permute.xlu0 %1142
      %1144 = vrot.lane.b32.xlu0 %v813, 64
      %v1145 = vpop.permute.xlu0 %1144
      %1146 = vrot.lane.b32.xlu0 %v814, 64
      %v1147 = vpop.permute.xlu0 %1146
      %1148 = vrot.lane.b32.xlu0 %v815, 64
      %v1149 = vpop.permute.xlu0 %1148
      %1150 = vrot.lane.b32.xlu0 %v816, 64
      %v1151 = vpop.permute.xlu0 %1150
      %1152 = vrot.lane.b32.xlu0 %v817, 64
      %v1153 = vpop.permute.xlu0 %1152
      %1154 = vrot.lane.b32.xlu0 %v818, 64
      %v1155 = vpop.permute.xlu0 %1154
      %1156 = vrot.lane.b32.xlu0 %v819, 64
      %v1157 = vpop.permute.xlu0 %1156
      %1158 = vrot.lane.b32.xlu0 %v884, 64
      %v1159 = vpop.permute.xlu0 %1158
      %vm1160 = vcmask 523264
      %v1161 = vsel %vm1160, %v1125, %v1127
      %v1162 = vsel %vm1160, %v1127, %v1129
      %v1163 = vsel %vm1160, %v1129, %v1131
      %v1164 = vsel %vm1160, %v1131, %v1133
      %v1165 = vsel %vm1160, %v1133, %v1135
      %v1166 = vsel %vm1160, %v1135, %v1137
      %v1167 = vsel %vm1160, %v1137, %v1139
      %v1168 = vsel %vm1160, %v1139, %v1141
      %v1169 = vsel %vm1160, %v1143, %v1145
      %v1170 = vsel %vm1160, %v1145, %v1147
      %v1171 = vsel %vm1160, %v1147, %v1149
      %v1172 = vsel %vm1160, %v1149, %v1151
      %v1173 = vsel %vm1160, %v1151, %v1153
      %v1174 = vsel %vm1160, %v1153, %v1155
      %v1175 = vsel %vm1160, %v1155, %v1157
      %v1176 = vsel %vm1160, %v1157, %v1159
      %v1185 = vld [vmem:[%s1] sm:$0xff]
      %v1186 = vld [vmem:[%s1 + $0x8] sm:$0xff]
      %v1187 = vld [vmem:[%s1 + $0x10] sm:$0xff]
      %v1188 = vld [vmem:[%s1 + $0x18] sm:$0xff]
      %v1189 = vld [vmem:[%s1 + $0x20] sm:$0xff]
      %v1190 = vld [vmem:[%s1 + $0x28] sm:$0xff]
      %v1191 = vld [vmem:[%s1 + $0x30] sm:$0xff]
      %v1192 = vld [vmem:[%s1 + $0x38] sm:$0xf]
      %v1193 = vld [vmem:[%s2] sm:$0xff]
      %v1194 = vld [vmem:[%s2 + $0x8] sm:$0xff]
      %v1195 = vld [vmem:[%s2 + $0x10] sm:$0xff]
      %v1196 = vld [vmem:[%s2 + $0x18] sm:$0xff]
      %v1197 = vld [vmem:[%s2 + $0x20] sm:$0xff]
      %v1198 = vld [vmem:[%s2 + $0x28] sm:$0xff]
      %v1199 = vld [vmem:[%s2 + $0x30] sm:$0xff]
      %v1200 = vld [vmem:[%s2 + $0x38] sm:$0xf]
      %1202 = vset.pattern.permute.xlu0 0
      %1203 = vperm.xlu0 %1202, %v1193
      %v1204 = vpop.permute.xlu0 %1203
      %1207 = vset.pattern.permute.xlu0 0
      %1208 = vperm.xlu0 %1207, %v1194
      %v1209 = vpop.permute.xlu0 %1208
      %1212 = vset.pattern.permute.xlu0 0
      %1213 = vperm.xlu0 %1212, %v1195
      %v1214 = vpop.permute.xlu0 %1213
      %1217 = vset.pattern.permute.xlu0 0
      %1218 = vperm.xlu0 %1217, %v1196
      %v1219 = vpop.permute.xlu0 %1218
      %1222 = vset.pattern.permute.xlu0 0
      %1223 = vperm.xlu0 %1222, %v1197
      %v1224 = vpop.permute.xlu0 %1223
      %1227 = vset.pattern.permute.xlu0 0
      %1228 = vperm.xlu0 %1227, %v1198
      %v1229 = vpop.permute.xlu0 %1228
      %1232 = vset.pattern.permute.xlu0 0
      %1233 = vperm.xlu0 %1232, %v1199
      %v1234 = vpop.permute.xlu0 %1233
      %1237 = vset.pattern.permute.xlu0 0
      %1238 = vperm.xlu0 %1237, %v1200
      %v1239 = vpop.permute.xlu0 %1238
      %vm1241 = vcmask 613376
      %v1243 = vsel %vm1241, %v1185, 0
      %v1246 = vsel %vm1241, %v1186, 0
      %v1249 = vsel %vm1241, %v1187, 0
      %v1252 = vsel %vm1241, %v1188, 0
      %v1255 = vsel %vm1241, %v1189, 0
      %v1258 = vsel %vm1241, %v1190, 0
      %v1261 = vsel %vm1241, %v1191, 0
      %v1264 = vsel %vm1241, %v1192, 0
      %v1266 = vsel %vm759, %v1169, 0
      %v1268 = vsel %vm759, %v1170, 0
      %v1270 = vsel %vm759, %v1171, 0
      %v1272 = vsel %vm759, %v1172, 0
      %v1274 = vsel %vm759, %v1173, 0
      %v1276 = vsel %vm759, %v1174, 0
      %v1278 = vsel %vm759, %v1175, 0
      %v1280 = vsel %vm759, %v1176, 0
      %1282 = vmatprep.subr.mxu0 %v797
      %1283 = vmatpush1.msra.mxu0 %v796
      %1284 = vmatprep.subr.mxu0 %v853
      %1285 = vmatpush1.msra.mxu0 %v852
      %1286 = vmatprep.subr.mxu0 %v946
      %1287 = vmatpush1.msra.mxu0 %v945
      %1288 = vmatprep.subr.mxu0 %v954
      %1289 = vmatpush1.msra.mxu0 %v953
      %1290 = vmatprep.subr.mxu0 %v1015
      %1291 = vmatpush1.msra.mxu0 %v1014
      %1292 = vmatprep.subr.mxu0 %v1023
      %1293 = vmatpush1.msra.mxu0 %v1022
      %1294 = vmatprep.subr.mxu0 %v1084
      %1295 = vmatpush1.msra.mxu0 %v1083
      %1296 = vmatprep.subr.mxu0 %v1092
      %1297 = vmatpush1.msra.mxu0 %v1091
      %1298 = vmatprep.subr.mxu0 %v1162
      %1299 = vmatpush1.msra.mxu0 %v1161
      %1300 = vmatprep.subr.mxu0 %v1268
      %1301 = vmatpush1.msra.mxu0 %v1266
      %1302 = vmatprep.subr.mxu0 0.0
      %1303 = vmatpush1.msra.mxu0 0.0
      %1304 = vmatprep.subr.mxu0 0.0
      %1305 = vmatpush1.msra.mxu0 0.0
      %1306 = vmatprep.subr.mxu0 0.0
      %1307 = vmatpush1.msra.mxu0 0.0
      %1308 = vmatprep.subr.mxu0 0.0
      %1309 = vmatpush1.msra.mxu0 0.0
      %1310 = vmatprep.subr.mxu0 0.0
      %1311 = vmatpush1.msra.mxu0 0.0
      %1312 = vmatprep.subr.mxu0 0.0
      %1313 = vmatpush1.msra.mxu0 0.0
      %1314 = vmatprep.subr.mxu0 0.0
      %1315 = vmatpush1.msra.mxu0 0.0
      %1316 = vmatprep.subr.mxu0 0.0
      %1317 = vmatpush1.msra.mxu0 0.0
      %1318 = vmatprep.subr.mxu0 0.0
      %1319 = vmatpush1.msra.mxu0 0.0
      %1320 = vmatprep.subr.mxu0 0.0
      %1321 = vmatpush1.msra.mxu0 0.0
      %1322 = vmatprep.subr.mxu0 0.0
      %1323 = vmatpush1.msra.mxu0 0.0
      %1324 = vmatprep.subr.mxu0 0.0
      %1325 = vmatpush1.msra.mxu0 0.0
      %1326 = vmatprep.subr.mxu0 0.0
      %1327 = vmatpush1.msra.mxu0 0.0
      %1328 = vmatprep.subr.mxu0 0.0
      %1329 = vmatpush1.msra.mxu0 0.0
      %1330 = vmatprep.subr.mxu0 0.0
      %1331 = vmatpush1.msra.mxu0 0.0
      %1332 = vmatprep.subr.mxu0 0.0
      %1333 = vmatpush1.msra.mxu0 0.0
      %1334 = vmatprep.subr.mxu0 0.0
      %1335 = vmatpush1.msra.mxu0 0.0
      %1336 = vmatprep.subr.mxu0 0.0
      %1337 = vmatpush1.msra.mxu0 0.0
      %1338 = vmatprep.subr.mxu0 0.0
      %1339 = vmatpush1.msra.mxu0 0.0
      %1340 = vmatprep.subr.mxu0 0.0
      %1341 = vmatpush1.msra.mxu0 0.0
      %1342 = vmatprep.subr.mxu0 0.0
      %1343 = vmatpush1.msra.mxu0 0.0
      %1344 = vmatprep.subr.mxu0 0.0
      %1345 = vmatpush1.msra.mxu0 0.0
      %1346 = vmatprep.mubr.f32.mxu0 0.0
      %1347 = vmatmul.mubr.f32.gmra.mrb[0].mxu0 %v1243
      %v1348 = vpop.f32.mrb[0].mxu0
      %v1349 = vadd.f32 %v1204, %v1348
      %v1350 = vpop.f32.mrb[0].mxu0
      %v1351 = vadd.f32 %v1204, %v1350
      %1352 = vmatprep.mubr.f32.mxu0 0.0
      %1353 = vmatmul.mubr.f32.gmra.mrb[0].mxu0 %v1246
      %v1354 = vpop.f32.mrb[0].mxu0
      %v1355 = vadd.f32 %v1209, %v1354
      %v1356 = vpop.f32.mrb[0].mxu0
      %v1357 = vadd.f32 %v1209, %v1356
      %1358 = vmatprep.mubr.f32.mxu0 0.0
      %1359 = vmatmul.mubr.f32.gmra.mrb[0].mxu0 %v1249
      %v1360 = vpop.f32.mrb[0].mxu0
      %v1361 = vadd.f32 %v1214, %v1360
      %v1362 = vpop.f32.mrb[0].mxu0
      %v1363 = vadd.f32 %v1214, %v1362
      %1364 = vmatprep.mubr.f32.mxu0 0.0
      %1365 = vmatmul.mubr.f32.gmra.mrb[0].mxu0 %v1252
      %v1366 = vpop.f32.mrb[0].mxu0
      %v1367 = vadd.f32 %v1219, %v1366
      %v1368 = vpop.f32.mrb[0].mxu0
      %v1369 = vadd.f32 %v1219, %v1368
      %1370 = vmatprep.mubr.f32.mxu0 0.0
      %1371 = vmatmul.mubr.f32.gmra.mrb[0].mxu0 %v1255
      %v1372 = vpop.f32.mrb[0].mxu0
      %v1373 = vadd.f32 %v1224, %v1372
      %v1374 = vpop.f32.mrb[0].mxu0
      %v1375 = vadd.f32 %v1224, %v1374
      %1376 = vmatprep.mubr.f32.mxu0 0.0
      %1377 = vmatmul.mubr.f32.gmra.mrb[0].mxu0 %v1258
      %v1378 = vpop.f32.mrb[0].mxu0
      %v1379 = vadd.f32 %v1229, %v1378
      %v1380 = vpop.f32.mrb[0].mxu0
      %v1381 = vadd.f32 %v1229, %v1380
      %1382 = vmatprep.mubr.f32.mxu0 0.0
      %1383 = vmatmul.mubr.f32.gmra.mrb[0].mxu0 %v1261
      %v1384 = vpop.f32.mrb[0].mxu0
      %v1385 = vadd.f32 %v1234, %v1384
      %v1386 = vpop.f32.mrb[0].mxu0
      %v1387 = vadd.f32 %v1234, %v1386
      %1388 = vmatprep.mubr.f32.mxu0 0.0
      %1389 = vmatmul.mubr.f32.gmra.mrb[0].mxu0 %v1264
      %v1390 = vpop.f32.mrb[0].mxu0
      %v1391 = vadd.f32 %v1239, %v1390
      %v1392 = vpop.f32.mrb[0].mxu0
      %v1393 = vadd.f32 %v1239, %v1392
      %1394 = vdwg.mxu0
      %1395 = vmatprep.subr.mxu0 %v799
      %1396 = vmatpush1.msra.mxu0 %v798
      %1397 = vmatprep.subr.mxu0 %v855
      %1398 = vmatpush1.msra.mxu0 %v854
      %1399 = vmatprep.subr.mxu0 %v948
      %1400 = vmatpush1.msra.mxu0 %v947
      %1401 = vmatprep.subr.mxu0 %v956
      %1402 = vmatpush1.msra.mxu0 %v955
      %1403 = vmatprep.subr.mxu0 %v1017
      %1404 = vmatpush1.msra.mxu0 %v1016
      %1405 = vmatprep.subr.mxu0 %v1025
      %1406 = vmatpush1.msra.mxu0 %v1024
      %1407 = vmatprep.subr.mxu0 %v1086
      %1408 = vmatpush1.msra.mxu0 %v1085
      %1409 = vmatprep.subr.mxu0 %v1094
      %1410 = vmatpush1.msra.mxu0 %v1093
      %1411 = vmatprep.subr.mxu0 %v1164
      %1412 = vmatpush1.msra.mxu0 %v1163
      %1413 = vmatprep.subr.mxu0 %v1272
      %1414 = vmatpush1.msra.mxu0 %v1270
      %1415 = vmatprep.subr.mxu0 0.0
      %1416 = vmatpush1.msra.mxu0 0.0
      %1417 = vmatprep.subr.mxu0 0.0
      %1418 = vmatpush1.msra.mxu0 0.0
      %1419 = vmatprep.subr.mxu0 0.0
      %1420 = vmatpush1.msra.mxu0 0.0
      %1421 = vmatprep.subr.mxu0 0.0
      %1422 = vmatpush1.msra.mxu0 0.0
      %1423 = vmatprep.subr.mxu0 0.0
      %1424 = vmatpush1.msra.mxu0 0.0
      %1425 = vmatprep.subr.mxu0 0.0
      %1426 = vmatpush1.msra.mxu0 0.0
      %1427 = vmatprep.subr.mxu0 0.0
      %1428 = vmatpush1.msra.mxu0 0.0
      %1429 = vmatprep.subr.mxu0 0.0
      %1430 = vmatpush1.msra.mxu0 0.0
      %1431 = vmatprep.subr.mxu0 0.0
      %1432 = vmatpush1.msra.mxu0 0.0
      %1433 = vmatprep.subr.mxu0 0.0
      %1434 = vmatpush1.msra.mxu0 0.0
      %1435 = vmatprep.subr.mxu0 0.0
      %1436 = vmatpush1.msra.mxu0 0.0
      %1437 = vmatprep.subr.mxu0 0.0
      %1438 = vmatpush1.msra.mxu0 0.0
      %1439 = vmatprep.subr.mxu0 0.0
      %1440 = vmatpush1.msra.mxu0 0.0
      %1441 = vmatprep.subr.mxu0 0.0
      %1442 = vmatpush1.msra.mxu0 0.0
      %1443 = vmatprep.subr.mxu0 0.0
      %1444 = vmatpush1.msra.mxu0 0.0
      %1445 = vmatprep.subr.mxu0 0.0
      %1446 = vmatpush1.msra.mxu0 0.0
      %1447 = vmatprep.subr.mxu0 0.0
      %1448 = vmatpush1.msra.mxu0 0.0
      %1449 = vmatprep.subr.mxu0 0.0
      %1450 = vmatpush1.msra.mxu0 0.0
      %1451 = vmatprep.subr.mxu0 0.0
      %1452 = vmatpush1.msra.mxu0 0.0
      %1453 = vmatprep.subr.mxu0 0.0
      %1454 = vmatpush1.msra.mxu0 0.0
      %1455 = vmatprep.subr.mxu0 0.0
      %1456 = vmatpush1.msra.mxu0 0.0
      %1457 = vmatprep.subr.mxu0 0.0
      %1458 = vmatpush1.msra.mxu0 0.0
      %1459 = vmatprep.mubr.f32.mxu0 0.0
      %1460 = vmatmul.mubr.f32.gmra.mrb[0].mxu0 %v1243
      %v1461 = vpop.f32.mrb[0].mxu0
      %v1462 = vadd.f32 %v1204, %v1461
      %v1463 = vpop.f32.mrb[0].mxu0
      %v1464 = vadd.f32 %v1204, %v1463
      %1465 = vmatprep.mubr.f32.mxu0 0.0
      %1466 = vmatmul.mubr.f32.gmra.mrb[0].mxu0 %v1246
      %v1467 = vpop.f32.mrb[0].mxu0
      %v1468 = vadd.f32 %v1209, %v1467
      %v1469 = vpop.f32.mrb[0].mxu0
      %v1470 = vadd.f32 %v1209, %v1469
      %1471 = vmatprep.mubr.f32.mxu0 0.0
      %1472 = vmatmul.mubr.f32.gmra.mrb[0].mxu0 %v1249
      %v1473 = vpop.f32.mrb[0].mxu0
      %v1474 = vadd.f32 %v1214, %v1473
      %v1475 = vpop.f32.mrb[0].mxu0
      %v1476 = vadd.f32 %v1214, %v1475
      %1477 = vmatprep.mubr.f32.mxu0 0.0
      %1478 = vmatmul.mubr.f32.gmra.mrb[0].mxu0 %v1252
      %v1479 = vpop.f32.mrb[0].mxu0
      %v1480 = vadd.f32 %v1219, %v1479
      %v1481 = vpop.f32.mrb[0].mxu0
      %v1482 = vadd.f32 %v1219, %v1481
      %1483 = vmatprep.mubr.f32.mxu0 0.0
      %1484 = vmatmul.mubr.f32.gmra.mrb[0].mxu0 %v1255
      %v1485 = vpop.f32.mrb[0].mxu0
      %v1486 = vadd.f32 %v1224, %v1485
      %v1487 = vpop.f32.mrb[0].mxu0
      %v1488 = vadd.f32 %v1224, %v1487
      %1489 = vmatprep.mubr.f32.mxu0 0.0
      %1490 = vmatmul.mubr.f32.gmra.mrb[0].mxu0 %v1258
      %v1491 = vpop.f32.mrb[0].mxu0
      %v1492 = vadd.f32 %v1229, %v1491
      %v1493 = vpop.f32.mrb[0].mxu0
      %v1494 = vadd.f32 %v1229, %v1493
      %1495 = vmatprep.mubr.f32.mxu0 0.0
      %1496 = vmatmul.mubr.f32.gmra.mrb[0].mxu0 %v1261
      %v1497 = vpop.f32.mrb[0].mxu0
      %v1498 = vadd.f32 %v1234, %v1497
      %v1499 = vpop.f32.mrb[0].mxu0
      %v1500 = vadd.f32 %v1234, %v1499
      %1501 = vmatprep.mubr.f32.mxu0 0.0
      %1502 = vmatmul.mubr.f32.gmra.mrb[0].mxu0 %v1264
      %v1503 = vpop.f32.mrb[0].mxu0
      %v1504 = vadd.f32 %v1239, %v1503
      %v1505 = vpop.f32.mrb[0].mxu0
      %v1506 = vadd.f32 %v1239, %v1505
      %1507 = vdwg.mxu0
      %1508 = vmatprep.subr.mxu0 %v801
      %1509 = vmatpush1.msra.mxu0 %v800
      %1510 = vmatprep.subr.mxu0 %v857
      %1511 = vmatpush1.msra.mxu0 %v856
      %1512 = vmatprep.subr.mxu0 %v950
      %1513 = vmatpush1.msra.mxu0 %v949
      %1514 = vmatprep.subr.mxu0 %v958
      %1515 = vmatpush1.msra.mxu0 %v957
      %1516 = vmatprep.subr.mxu0 %v1019
      %1517 = vmatpush1.msra.mxu0 %v1018
      %1518 = vmatprep.subr.mxu0 %v1027
      %1519 = vmatpush1.msra.mxu0 %v1026
      %1520 = vmatprep.subr.mxu0 %v1088
      %1521 = vmatpush1.msra.mxu0 %v1087
      %1522 = vmatprep.subr.mxu0 %v1096
      %1523 = vmatpush1.msra.mxu0 %v1095
      %1524 = vmatprep.subr.mxu0 %v1166
      %1525 = vmatpush1.msra.mxu0 %v1165
      %1526 = vmatprep.subr.mxu0 %v1276
      %1527 = vmatpush1.msra.mxu0 %v1274
      %1528 = vmatprep.subr.mxu0 0.0
      %1529 = vmatpush1.msra.mxu0 0.0
      %1530 = vmatprep.subr.mxu0 0.0
      %1531 = vmatpush1.msra.mxu0 0.0
      %1532 = vmatprep.subr.mxu0 0.0
      %1533 = vmatpush1.msra.mxu0 0.0
      %1534 = vmatprep.subr.mxu0 0.0
      %1535 = vmatpush1.msra.mxu0 0.0
      %1536 = vmatprep.subr.mxu0 0.0
      %1537 = vmatpush1.msra.mxu0 0.0
      %1538 = vmatprep.subr.mxu0 0.0
      %1539 = vmatpush1.msra.mxu0 0.0
      %1540 = vmatprep.subr.mxu0 0.0
      %1541 = vmatpush1.msra.mxu0 0.0
      %1542 = vmatprep.subr.mxu0 0.0
      %1543 = vmatpush1.msra.mxu0 0.0
      %1544 = vmatprep.subr.mxu0 0.0
      %1545 = vmatpush1.msra.mxu0 0.0
      %1546 = vmatprep.subr.mxu0 0.0
      %1547 = vmatpush1.msra.mxu0 0.0
      %1548 = vmatprep.subr.mxu0 0.0
      %1549 = vmatpush1.msra.mxu0 0.0
      %1550 = vmatprep.subr.mxu0 0.0
      %1551 = vmatpush1.msra.mxu0 0.0
      %1552 = vmatprep.subr.mxu0 0.0
      %1553 = vmatpush1.msra.mxu0 0.0
      %1554 = vmatprep.subr.mxu0 0.0
      %1555 = vmatpush1.msra.mxu0 0.0
      %1556 = vmatprep.subr.mxu0 0.0
      %1557 = vmatpush1.msra.mxu0 0.0
      %1558 = vmatprep.subr.mxu0 0.0
      %1559 = vmatpush1.msra.mxu0 0.0
      %1560 = vmatprep.subr.mxu0 0.0
      %1561 = vmatpush1.msra.mxu0 0.0
      %1562 = vmatprep.subr.mxu0 0.0
      %1563 = vmatpush1.msra.mxu0 0.0
      %1564 = vmatprep.subr.mxu0 0.0
      %1565 = vmatpush1.msra.mxu0 0.0
      %1566 = vmatprep.subr.mxu0 0.0
      %1567 = vmatpush1.msra.mxu0 0.0
      %1568 = vmatprep.subr.mxu0 0.0
      %1569 = vmatpush1.msra.mxu0 0.0
      %1570 = vmatprep.subr.mxu0 0.0
      %1571 = vmatpush1.msra.mxu0 0.0
      %1572 = vmatprep.mubr.f32.mxu0 0.0
      %1573 = vmatmul.mubr.f32.gmra.mrb[0].mxu0 %v1243
      %v1574 = vpop.f32.mrb[0].mxu0
      %v1575 = vadd.f32 %v1204, %v1574
      %v1576 = vpop.f32.mrb[0].mxu0
      %v1577 = vadd.f32 %v1204, %v1576
      %1578 = vmatprep.mubr.f32.mxu0 0.0
      %1579 = vmatmul.mubr.f32.gmra.mrb[0].mxu0 %v1246
      %v1580 = vpop.f32.mrb[0].mxu0
      %v1581 = vadd.f32 %v1209, %v1580
      %v1582 = vpop.f32.mrb[0].mxu0
      %v1583 = vadd.f32 %v1209, %v1582
      %1584 = vmatprep.mubr.f32.mxu0 0.0
      %1585 = vmatmul.mubr.f32.gmra.mrb[0].mxu0 %v1249
      %v1586 = vpop.f32.mrb[0].mxu0
      %v1587 = vadd.f32 %v1214, %v1586
      %v1588 = vpop.f32.mrb[0].mxu0
      %v1589 = vadd.f32 %v1214, %v1588
      %1590 = vmatprep.mubr.f32.mxu0 0.0
      %1591 = vmatmul.mubr.f32.gmra.mrb[0].mxu0 %v1252
      %v1592 = vpop.f32.mrb[0].mxu0
      %v1593 = vadd.f32 %v1219, %v1592
      %v1594 = vpop.f32.mrb[0].mxu0
      %v1595 = vadd.f32 %v1219, %v1594
      %1596 = vmatprep.mubr.f32.mxu0 0.0
      %1597 = vmatmul.mubr.f32.gmra.mrb[0].mxu0 %v1255
      %v1598 = vpop.f32.mrb[0].mxu0
      %v1599 = vadd.f32 %v1224, %v1598
      %v1600 = vpop.f32.mrb[0].mxu0
      %v1601 = vadd.f32 %v1224, %v1600
      %1602 = vmatprep.mubr.f32.mxu0 0.0
      %1603 = vmatmul.mubr.f32.gmra.mrb[0].mxu0 %v1258
      %v1604 = vpop.f32.mrb[0].mxu0
      %v1605 = vadd.f32 %v1229, %v1604
      %v1606 = vpop.f32.mrb[0].mxu0
      %v1607 = vadd.f32 %v1229, %v1606
      %1608 = vmatprep.mubr.f32.mxu0 0.0
      %1609 = vmatmul.mubr.f32.gmra.mrb[0].mxu0 %v1261
      %v1610 = vpop.f32.mrb[0].mxu0
      %v1611 = vadd.f32 %v1234, %v1610
      %v1612 = vpop.f32.mrb[0].mxu0
      %v1613 = vadd.f32 %v1234, %v1612
      %1614 = vmatprep.mubr.f32.mxu0 0.0
      %1615 = vmatmul.mubr.f32.gmra.mrb[0].mxu0 %v1264
      %v1616 = vpop.f32.mrb[0].mxu0
      %v1617 = vadd.f32 %v1239, %v1616
      %v1618 = vpop.f32.mrb[0].mxu0
      %v1619 = vadd.f32 %v1239, %v1618
      %1620 = vdwg.mxu0
      %1621 = vmatprep.subr.mxu0 %v803
      %1622 = vmatpush1.msra.mxu0 %v802
      %1623 = vmatprep.subr.mxu0 %v859
      %1624 = vmatpush1.msra.mxu0 %v858
      %1625 = vmatprep.subr.mxu0 %v952
      %1626 = vmatpush1.msra.mxu0 %v951
      %1627 = vmatprep.subr.mxu0 %v960
      %1628 = vmatpush1.msra.mxu0 %v959
      %1629 = vmatprep.subr.mxu0 %v1021
      %1630 = vmatpush1.msra.mxu0 %v1020
      %1631 = vmatprep.subr.mxu0 %v1029
      %1632 = vmatpush1.msra.mxu0 %v1028
      %1633 = vmatprep.subr.mxu0 %v1090
      %1634 = vmatpush1.msra.mxu0 %v1089
      %1635 = vmatprep.subr.mxu0 %v1098
      %1636 = vmatpush1.msra.mxu0 %v1097
      %1637 = vmatprep.subr.mxu0 %v1168
      %1638 = vmatpush1.msra.mxu0 %v1167
      %1639 = vmatprep.subr.mxu0 %v1280
      %1640 = vmatpush1.msra.mxu0 %v1278
      %1641 = vmatprep.subr.mxu0 0.0
      %1642 = vmatpush1.msra.mxu0 0.0
      %1643 = vmatprep.subr.mxu0 0.0
      %1644 = vmatpush1.msra.mxu0 0.0
      %1645 = vmatprep.subr.mxu0 0.0
      %1646 = vmatpush1.msra.mxu0 0.0
      %1647 = vmatprep.subr.mxu0 0.0
      %1648 = vmatpush1.msra.mxu0 0.0
      %1649 = vmatprep.subr.mxu0 0.0
      %1650 = vmatpush1.msra.mxu0 0.0
      %1651 = vmatprep.subr.mxu0 0.0
      %1652 = vmatpush1.msra.mxu0 0.0
      %1653 = vmatprep.subr.mxu0 0.0
      %1654 = vmatpush1.msra.mxu0 0.0
      %1655 = vmatprep.subr.mxu0 0.0
      %1656 = vmatpush1.msra.mxu0 0.0
      %1657 = vmatprep.subr.mxu0 0.0
      %1658 = vmatpush1.msra.mxu0 0.0
      %1659 = vmatprep.subr.mxu0 0.0
      %1660 = vmatpush1.msra.mxu0 0.0
      %1661 = vmatprep.subr.mxu0 0.0
      %1662 = vmatpush1.msra.mxu0 0.0
      %1663 = vmatprep.subr.mxu0 0.0
      %1664 = vmatpush1.msra.mxu0 0.0
      %1665 = vmatprep.subr.mxu0 0.0
      %1666 = vmatpush1.msra.mxu0 0.0
      %1667 = vmatprep.subr.mxu0 0.0
      %1668 = vmatpush1.msra.mxu0 0.0
      %1669 = vmatprep.subr.mxu0 0.0
      %1670 = vmatpush1.msra.mxu0 0.0
      %1671 = vmatprep.subr.mxu0 0.0
      %1672 = vmatpush1.msra.mxu0 0.0
      %1673 = vmatprep.subr.mxu0 0.0
      %1674 = vmatpush1.msra.mxu0 0.0
      %1675 = vmatprep.subr.mxu0 0.0
      %1676 = vmatpush1.msra.mxu0 0.0
      %1677 = vmatprep.subr.mxu0 0.0
      %1678 = vmatpush1.msra.mxu0 0.0
      %1679 = vmatprep.subr.mxu0 0.0
      %1680 = vmatpush1.msra.mxu0 0.0
      %1681 = vmatprep.subr.mxu0 0.0
      %1682 = vmatpush1.msra.mxu0 0.0
      %1683 = vmatprep.subr.mxu0 0.0
      %1684 = vmatpush1.msra.mxu0 0.0
      %1685 = vmatprep.mubr.f32.mxu0 0.0
      %1686 = vmatmul.mubr.f32.gmra.mrb[0].mxu0 %v1243
      %v1687 = vpop.f32.mrb[0].mxu0
      %v1688 = vadd.f32 %v1204, %v1687
      %v1689 = vpop.f32.mrb[0].mxu0
      %v1690 = vadd.f32 %v1204, %v1689
      %1691 = vmatprep.mubr.f32.mxu0 0.0
      %1692 = vmatmul.mubr.f32.gmra.mrb[0].mxu0 %v1246
      %v1693 = vpop.f32.mrb[0].mxu0
      %v1694 = vadd.f32 %v1209, %v1693
      %v1695 = vpop.f32.mrb[0].mxu0
      %v1696 = vadd.f32 %v1209, %v1695
      %1697 = vmatprep.mubr.f32.mxu0 0.0
      %1698 = vmatmul.mubr.f32.gmra.mrb[0].mxu0 %v1249
      %v1699 = vpop.f32.mrb[0].mxu0
      %v1700 = vadd.f32 %v1214, %v1699
      %v1701 = vpop.f32.mrb[0].mxu0
      %v1702 = vadd.f32 %v1214, %v1701
      %1703 = vmatprep.mubr.f32.mxu0 0.0
      %1704 = vmatmul.mubr.f32.gmra.mrb[0].mxu0 %v1252
      %v1705 = vpop.f32.mrb[0].mxu0
      %v1706 = vadd.f32 %v1219, %v1705
      %v1707 = vpop.f32.mrb[0].mxu0
      %v1708 = vadd.f32 %v1219, %v1707
      %1709 = vmatprep.mubr.f32.mxu0 0.0
      %1710 = vmatmul.mubr.f32.gmra.mrb[0].mxu0 %v1255
      %v1711 = vpop.f32.mrb[0].mxu0
      %v1712 = vadd.f32 %v1224, %v1711
      %v1713 = vpop.f32.mrb[0].mxu0
      %v1714 = vadd.f32 %v1224, %v1713
      %1715 = vmatprep.mubr.f32.mxu0 0.0
      %1716 = vmatmul.mubr.f32.gmra.mrb[0].mxu0 %v1258
      %v1717 = vpop.f32.mrb[0].mxu0
      %v1718 = vadd.f32 %v1229, %v1717
      %v1719 = vpop.f32.mrb[0].mxu0
      %v1720 = vadd.f32 %v1229, %v1719
      %1721 = vmatprep.mubr.f32.mxu0 0.0
      %1722 = vmatmul.mubr.f32.gmra.mrb[0].mxu0 %v1261
      %v1723 = vpop.f32.mrb[0].mxu0
      %v1724 = vadd.f32 %v1234, %v1723
      %v1725 = vpop.f32.mrb[0].mxu0
      %v1726 = vadd.f32 %v1234, %v1725
      %1727 = vmatprep.mubr.f32.mxu0 0.0
      %1728 = vmatmul.mubr.f32.gmra.mrb[0].mxu0 %v1264
      %v1729 = vpop.f32.mrb[0].mxu0
      %v1730 = vadd.f32 %v1239, %v1729
      %v1731 = vpop.f32.mrb[0].mxu0
      %v1732 = vadd.f32 %v1239, %v1731
      %1733 = vdwg.mxu0
      %1734 = vst [vmem:[%s167] sm:$0xff] %v1349
      %1735 = vst [vmem:[%s167 + $0x8] sm:$0xff] %v1351
      %1736 = vst [vmem:[%s167 + $0x10] sm:$0xff] %v1462
      %1737 = vst [vmem:[%s167 + $0x18] sm:$0xff] %v1464
      %1738 = vst [vmem:[%s167 + $0x20] sm:$0xff] %v1575
      %1739 = vst [vmem:[%s167 + $0x28] sm:$0xff] %v1577
      %1740 = vst [vmem:[%s167 + $0x30] sm:$0xff] %v1688
      %1741 = vst [vmem:[%s167 + $0x38] sm:$0xff] %v1690
      %1742 = vst [vmem:[%s167 + $0x40] sm:$0xff] %v1355
      %1743 = vst [vmem:[%s167 + $0x48] sm:$0xff] %v1357
      %1744 = vst [vmem:[%s167 + $0x50] sm:$0xff] %v1468
      %1745 = vst [vmem:[%s167 + $0x58] sm:$0xff] %v1470
      %1746 = vst [vmem:[%s167 + $0x60] sm:$0xff] %v1581
      %1747 = vst [vmem:[%s167 + $0x68] sm:$0xff] %v1583
      %1748 = vst [vmem:[%s167 + $0x70] sm:$0xff] %v1694
      %1749 = vst [vmem:[%s167 + $0x78] sm:$0xff] %v1696
      %1750 = vst [vmem:[%s167 + $0x80] sm:$0xff] %v1361
      %1751 = vst [vmem:[%s167 + $0x88] sm:$0xff] %v1363
      %1752 = vst [vmem:[%s167 + $0x90] sm:$0xff] %v1474
      %1753 = vst [vmem:[%s167 + $0x98] sm:$0xff] %v1476
      %1754 = vst [vmem:[%s167 + $0xa0] sm:$0xff] %v1587
      %1755 = vst [vmem:[%s167 + $0xa8] sm:$0xff] %v1589
      %1756 = vst [vmem:[%s167 + $0xb0] sm:$0xff] %v1700
      %1757 = vst [vmem:[%s167 + $0xb8] sm:$0xff] %v1702
      %1758 = vst [vmem:[%s167 + $0xc0] sm:$0xff] %v1367
      %1759 = vst [vmem:[%s167 + $0xc8] sm:$0xff] %v1369
      %1760 = vst [vmem:[%s167 + $0xd0] sm:$0xff] %v1480
      %1761 = vst [vmem:[%s167 + $0xd8] sm:$0xff] %v1482
      %1762 = vst [vmem:[%s167 + $0xe0] sm:$0xff] %v1593
      %1763 = vst [vmem:[%s167 + $0xe8] sm:$0xff] %v1595
      %1764 = vst [vmem:[%s167 + $0xf0] sm:$0xff] %v1706
      %1765 = vst [vmem:[%s167 + $0xf8] sm:$0xff] %v1708
      %1766 = vst [vmem:[%s167 + $0x100] sm:$0xff] %v1373
      %1767 = vst [vmem:[%s167 + $0x108] sm:$0xff] %v1375
      %1768 = vst [vmem:[%s167 + $0x110] sm:$0xff] %v1486
      %1769 = vst [vmem:[%s167 + $0x118] sm:$0xff] %v1488
      %1770 = vst [vmem:[%s167 + $0x120] sm:$0xff] %v1599
      %1771 = vst [vmem:[%s167 + $0x128] sm:$0xff] %v1601
      %1772 = vst [vmem:[%s167 + $0x130] sm:$0xff] %v1712
      %1773 = vst [vmem:[%s167 + $0x138] sm:$0xff] %v1714
      %1774 = vst [vmem:[%s167 + $0x140] sm:$0xff] %v1379
      %1775 = vst [vmem:[%s167 + $0x148] sm:$0xff] %v1381
      %1776 = vst [vmem:[%s167 + $0x150] sm:$0xff] %v1492
      %1777 = vst [vmem:[%s167 + $0x158] sm:$0xff] %v1494
      %1778 = vst [vmem:[%s167 + $0x160] sm:$0xff] %v1605
      %1779 = vst [vmem:[%s167 + $0x168] sm:$0xff] %v1607
      %1780 = vst [vmem:[%s167 + $0x170] sm:$0xff] %v1718
      %1781 = vst [vmem:[%s167 + $0x178] sm:$0xff] %v1720
      %1782 = vst [vmem:[%s167 + $0x180] sm:$0xff] %v1385
      %1783 = vst [vmem:[%s167 + $0x188] sm:$0xff] %v1387
      %1784 = vst [vmem:[%s167 + $0x190] sm:$0xff] %v1498
      %1785 = vst [vmem:[%s167 + $0x198] sm:$0xff] %v1500
      %1786 = vst [vmem:[%s167 + $0x1a0] sm:$0xff] %v1611
      %1787 = vst [vmem:[%s167 + $0x1a8] sm:$0xff] %v1613
      %1788 = vst [vmem:[%s167 + $0x1b0] sm:$0xff] %v1724
      %1789 = vst [vmem:[%s167 + $0x1b8] sm:$0xff] %v1726
      %1790 = vst [vmem:[%s167 + $0x1c0] sm:$0xf] %v1391
      %1791 = vst [vmem:[%s167 + $0x1c8] sm:$0xf] %v1393
      %1792 = vst [vmem:[%s167 + $0x1d0] sm:$0xf] %v1504
      %1793 = vst [vmem:[%s167 + $0x1d8] sm:$0xf] %v1506
      %1794 = vst [vmem:[%s167 + $0x1e0] sm:$0xf] %v1617
      %1795 = vst [vmem:[%s167 + $0x1e8] sm:$0xf] %v1619
      %1796 = vst [vmem:[%s167 + $0x1f0] sm:$0xf] %v1730
      %1797 = vst [vmem:[%s167 + $0x1f8] sm:$0xf] %v1732
      %p1798 = scmp.lt.s32.totalorder %s14, 1
      %s1799 = scalar_select %p1798, %s14, 1
      %s1800 = smul.addr %s1799, 64
      %s1801 = smul.addr %s1800, 8
      %s1802 = scalar_lea.vmem %s3, %s1801
      // Predicated region
      $region33: #{hs_conv_forward.1} parent=31 // pred_check
        %p1803 = pneg %p100
      $region34: #{hs_conv_forward.1} parent=31 // pred_check_branch
        %1805 = sbr.rel (%p1803) target = $region36
      $region35: #{hs_conv_forward.1} parent=31 // pred_region
        _
      $region36: #{hs_conv_forward.1} parent=31 // pred_fallthru
        _
    $region32: #{hs_conv_forward.1} parent=5 // pred_fallthru
      _
    %p1806 = scmp.le.s32.totalorder 2, %s9
    // Predicated region
    $region37: #{hs_conv_forward.1} parent=5 // pred_check
      %p1807 = pneg %p1806
    $region38: #{hs_conv_forward.1} parent=5 // pred_check_branch
      %1809 = sbr.rel (%p1807) target = $region40
    $region39: #{hs_conv_forward.1} parent=5 // pred_region
      %s1810 = ssub.s32 %s9, 2
      // Predicated region
      $region41: #{hs_conv_forward.1} parent=39 // pred_check
        %p1811 = pneg %p106
      $region42: #{hs_conv_forward.1} parent=39 // pred_check_branch
        %1813 = sbr.rel (%p1811) target = $region44
      $region43: #{hs_conv_forward.1} parent=39 // pred_region
        %p1814 = scmp.lt.s32.totalorder %s15, 1
        %s1815 = scalar_select %p1814, %s15, 1
        %s1816 = smul.addr %s1815, 64
        %s1817 = smul.addr %s1816, 8
        %s1818 = scalar_lea.vmem %s3, %s1817
      $region44: #{hs_conv_forward.1} parent=39 // pred_fallthru
        _
    $region40: #{hs_conv_forward.1} parent=5 // pred_fallthru
      _
  $region6: #{hs_conv_forward.1} parent=0 // loop_footer
    %s13 = sadd.s32 1, %s9
  $region7: #{hs_conv_forward.1} parent=0 // loop_footer_branch
    %8 = sbr.rel target = $region3
  $region8: #{hs_conv_forward.1} parent=0 // loop_exit
    _

</llo_original>
